<compile_context>
chip_gen: v6e
topology: v6e:2x2x1
jax: 0.10.0
libtpu: 0.0.40
codegen_flags: <defaults>
</compile_context>

<pallas_src>
import numpy as np
import jax
import jax.numpy as jnp
from jax import lax
from jax.experimental import pallas as pl
from jax.experimental.pallas import tpu as pltpu

# ---- hyper-parameters consistent with the module's __init__ ----
MODEL_DIM = 32
VOCAB_SIZE = 65
VOCAB_PAD = 128          # vocab padded to one full lane width (pos rows at 65..72)
BLOCK_SIZE = 8           # max sequence length (positional embedding table)
NUM_BLOCKS = 2
NUM_HEADS = 4
HEAD_SIZE = MODEL_DIM // NUM_HEADS
FFN_DIM = 4 * MODEL_DIM
BATCH = 2
SEQ = 8                  # T (<= BLOCK_SIZE)
EPS = 1e-5               # nn.LayerNorm default eps
NEG_INF = -1e9           # additive mask value
DEN_EPS = 1e-30          # guards against 0/0 if a head block underflows


def _layernorm(x, gamma, beta):
    """PyTorch-style LayerNorm over the last dim (biased variance), f32 math."""
    mu = jnp.mean(x, axis=-1, keepdims=True)
    xc = x - mu
    var = jnp.mean(xc * xc, axis=-1, keepdims=True)
    return xc * lax.rsqrt(var + EPS) * gamma + beta


def transformer_kernel(oh_ref, wa_ref, wb_ref, mc_ref, pc_ref, out_ref):
    n = oh_ref.shape[0]                      # B*T rows, flat the whole kernel
    D, H, hs = MODEL_DIM, NUM_HEADS, HEAD_SIZE
    F, L, P = FFN_DIM, NUM_BLOCKS, VOCAB_PAD

    # ---- constants, loaded ONCE (hoisted out of the layer loop) ----
    bias = mc_ref[0:n, 0:H * n]                       # (n, H*n) causal+batch mask
    hmask_T = mc_ref[n:n + D, 0:H * n]                # (D, H*n) head selector ^T
    hmask2 = mc_ref[n + D:n + D + H * n, 0:2 * D]     # (H*n, 2D) = [hmask | hmask]
    ones_nD = jnp.ones((n, D), jnp.float32)
    g1 = pc_ref[0:1, 0:D]
    be1 = pc_ref[0:1, D:2 * D]

    # ---- token + positional embedding as a single (n,128)x(128,D) matmul ----
    x = jnp.dot(oh_ref[...], wb_ref[0:P, :], preferred_element_type=jnp.float32)
    x = _layernorm(x, g1, be1)               # drop1 == identity (eval mode)

    for l in range(L):
        r = 1 + 3 * l
        g_att = pc_ref[r:r + 1, 0:D]
        b_att = pc_ref[r:r + 1, D:2 * D]
        g_ffn = pc_ref[r:r + 1, 2 * D:3 * D]
        b_ffn = pc_ref[r:r + 1, 3 * D:4 * D]
        bo = pc_ref[r + 1:r + 2, 0:D]                 # attn projection bias
        b2 = pc_ref[r + 1:r + 2, D:2 * D]             # ffn output bias
        b1 = pc_ref[r + 2:r + 3, :]                   # ffn hidden bias (1, 4D)

        wqkvo = wa_ref[2 * D * l:2 * D * l + D, :]    # (D, 4D) [Wq*s | Wk | Wv | Wo]
        w1 = wa_ref[2 * D * l + D:2 * D * (l + 1), :]  # (D, 4D)
        w2 = wb_ref[P + F * l:P + F * (l + 1), :]      # (4D, D)

        # -------- multi-head causal self-attention (pre-LN + residual) -------
        xn = _layernorm(x, g_att, b_att)                                   # (n, D)
        qkvo = jnp.dot(xn.astype(jnp.bfloat16), wqkvo,
                       preferred_element_type=jnp.float32)                 # (n, 4D)
        q = qkvo[:, 0:D]                      # 1/sqrt(hs) folded into Wq at pack time
        k = qkvo[:, D:2 * D]
        v = qkvo[:, 2 * D:3 * D]

        # block-diagonal K^T stack (D, H*n): one small transpose + lane tile + mask
        kT = jnp.transpose(k)                                              # (D, n)
        k_bd_T = jnp.concatenate([kT] * H, axis=1) * hmask_T               # (D, H*n)
        s = jnp.dot(q, k_bd_T, preferred_element_type=jnp.float32) + bias  # (n, H*n)

        # single softmax chain (row-global max is a valid per-row stabilizer)
        m = jnp.max(s, axis=-1, keepdims=True)
        p = jnp.exp(s - m)                                                 # (n, H*n)

        # fused numerator + denominator: ONE matmul against [v_bd | hmask]
        v_ext = jnp.concatenate([v, ones_nD], axis=1)                      # (n, 2D)
        vh = jnp.concatenate([v_ext] * H, axis=0) * hmask2                 # (H*n, 2D)
        nd = jnp.dot(p, vh, preferred_element_type=jnp.float32)            # (n, 2D)
        o = nd[:, 0:D] * pl.reciprocal(nd[:, D:2 * D] + DEN_EPS, approx=True)

        attn = jnp.dot(o.astype(jnp.bfloat16), wqkvo[:, 3 * D:4 * D],
                       preferred_element_type=jnp.float32) + bo
        x = x + attn                                                       # dropout = id

        # -------- feed-forward sublayer (pre-LN + residual) ------------------
        yn = _layernorm(x, g_ffn, b_ffn)
        h1 = jnp.maximum(
            jnp.dot(yn.astype(jnp.bfloat16), w1,
                    preferred_element_type=jnp.float32) + b1, 0.0)
        y = jnp.dot(h1.astype(jnp.bfloat16), w2,
                    preferred_element_type=jnp.float32) + b2
        x = x + y                                                          # dropout = id

    # final vocab projection (bias=False), 128-lane-dense store
    wd = wa_ref[2 * D * L:2 * D * L + D, :]
    out_ref[...] = jnp.dot(x.astype(jnp.bfloat16), wd,
                           preferred_element_type=jnp.float32)


def _mask_consts(B, T):
    """Compile-time mask/bias constants packed into one f32 slab (built with numpy)."""
    n = B * T
    D, H, hs = MODEL_DIM, NUM_HEADS, HEAD_SIZE
    c = np.arange(H * n)[None, :]
    j = c % n
    h = c // n
    i = np.arange(n)[:, None]
    allowed = (i // T == j // T) & (j % T <= i % T)
    bias = np.where(allowed, 0.0, NEG_INF).astype(np.float32)          # (n, H*n)
    d = np.arange(D)[:, None]
    hmask_T = (d // hs == h).astype(np.float32)                        # (D, H*n)
    hmask = hmask_T.T                                                  # (H*n, D)
    hmask2 = np.concatenate([hmask, hmask], axis=1)                    # (H*n, 2D)
    W = max(H * n, 2 * D)
    mc = np.zeros((n + D + H * n, W), np.float32)
    mc[0:n, 0:H * n] = bias
    mc[n:n + D, 0:H * n] = hmask_T
    mc[n + D:, 0:2 * D] = hmask2
    return jnp.asarray(mc)


def init_params(key):
    D, L, F, V, P = MODEL_DIM, NUM_BLOCKS, FFN_DIM, VOCAB_SIZE, VOCAB_PAD
    q_scale = float(HEAD_SIZE) ** -0.5
    ks = jax.random.split(key, 7)

    def norm(k, shape, s=0.02):
        return np.asarray(jax.random.normal(k, shape, dtype=jnp.float32)) * s

    E_tok = norm(ks[0], (V, D))
    posE = norm(ks[1], (BLOCK_SIZE, D))
    wqkv = norm(ks[2], (L, D, 3 * D))
    wo = norm(ks[3], (L, D, D))
    w1 = norm(ks[4], (L, D, F))
    w2 = norm(ks[5], (L, F, D))
    wd = norm(ks[6], (D, V))
    # linear biases are zero at init; LayerNorm gamma=1, beta=0.

    # ---- weight slab A (bf16, lane width 4D=128): per layer [Wq*s|Wk|Wv|Wo], W1; then Wd ----
    wA = np.zeros((L * 2 * D + D, 4 * D), np.float32)
    for l in range(L):
        r = 2 * D * l
        wA[r:r + D, 0:D] = wqkv[l, :, 0:D] * q_scale       # fold head scale into Wq
        wA[r:r + D, D:3 * D] = wqkv[l, :, D:3 * D]         # Wk | Wv
        wA[r:r + D, 3 * D:4 * D] = wo[l]                   # Wo
        wA[r + D:r + 2 * D, :] = w1[l]
    wA[L * 2 * D:L * 2 * D + D, 0:V] = wd                  # Wd padded to 128 lanes

    # ---- weight slab B (bf16, lane width D=32): embedding table + per-layer W2 ----
    wB = np.zeros((P + L * F, D), np.float32)
    wB[0:V] = E_tok                         # token rows 0..64
    wB[V:V + BLOCK_SIZE] = posE             # positional rows folded at 65..72
    for l in range(L):
        wB[P + F * l:P + F * (l + 1)] = w2[l]

    # ---- small f32 param slab (LayerNorm gamma/beta + biases), lane width 128 ----
    pc = np.zeros((8, 4 * D), np.float32)
    pc[0, 0:D] = 1.0                        # ln1 gamma (beta = 0)
    for l in range(L):
        r = 1 + 3 * l
        pc[r, 0:D] = 1.0                    # attn-LN gamma
        pc[r, 2 * D:3 * D] = 1.0            # ffn-LN gamma
        # pc[r+1]: [attn proj bias | ffn out bias] = zeros
        # pc[r+2]: ffn hidden bias b1 = zeros

    return dict(wA=jnp.asarray(wA, jnp.bfloat16),
                wB=jnp.asarray(wB, jnp.bfloat16),
                pc=jnp.asarray(pc, jnp.float32))


@jax.jit
def transformer_forward(x_tokens, params):
    B, T = x_tokens.shape
    ids = x_tokens.reshape(-1).astype(jnp.int32)
    pos = jnp.arange(B * T, dtype=jnp.int32) % T
    # one-hot selecting E[id] (rows 0..64) and posE[pos] (rows 65..72) in one matmul
    onehot = (jax.nn.one_hot(ids, VOCAB_PAD, dtype=jnp.bfloat16)
              + jax.nn.one_hot(VOCAB_SIZE + pos, VOCAB_PAD, dtype=jnp.bfloat16))
    mconst = _mask_consts(B, T)

    vmem = pl.BlockSpec(memory_space=pltpu.MemorySpace.VMEM)
    logits_pad = pl.pallas_call(
        transformer_kernel,
        out_shape=jax.ShapeDtypeStruct((B * T, VOCAB_PAD), jnp.float32),
        in_specs=[vmem] * 5,
        out_specs=vmem,
    )(onehot, params['wA'], params['wB'], mconst, params['pc'])
    # un-pad the vocab dimension and restore (B, T, V)
    return logits_pad[:, :VOCAB_SIZE].reshape(B, T, VOCAB_SIZE)


if __name__ == "__main__":
    key = jax.random.PRNGKey(0)
    pkey, xkey = jax.random.split(key)
    params = init_params(pkey)
    x = jax.random.randint(xkey, (BATCH, SEQ), 0, VOCAB_SIZE, dtype=jnp.int32)

    logits = transformer_forward(x, params)
    jax.block_until_ready(logits)
    assert logits.shape == (BATCH, SEQ, VOCAB_SIZE)
    assert bool(jnp.all(jnp.isfinite(logits)))
    print("KERNEL_OK")
</pallas_src>

<mosaic_0001>
module attributes {stable_mosaic.version = 11 : i64} {
  func.func @transformer_kernel(%arg0: memref<16x128xbf16, #tpu.memory_space<vmem>>, %arg1: memref<160x128xbf16, #tpu.memory_space<vmem>>, %arg2: memref<384x32xbf16, #tpu.memory_space<vmem>>, %arg3: memref<112x64xf32, #tpu.memory_space<vmem>>, %arg4: memref<8x128xf32, #tpu.memory_space<vmem>>, %arg5: memref<16x128xf32, #tpu.memory_space<vmem>>) attributes {dimension_semantics = [], scalar_prefetch = 0 : i64, scratch_operands = 0 : i64, tpu.core_type = #tpu.core_type<tc>} {
    %c0 = arith.constant 0 : index
    %c0_0 = arith.constant 0 : index
    %0 = vector.load %arg3[%c0, %c0_0] : memref<112x64xf32, #tpu.memory_space<vmem>>, vector<16x64xf32>
    %c16 = arith.constant 16 : index
    %c0_1 = arith.constant 0 : index
    %1 = vector.load %arg3[%c16, %c0_1] : memref<112x64xf32, #tpu.memory_space<vmem>>, vector<32x64xf32>
    %c48 = arith.constant 48 : index
    %c0_2 = arith.constant 0 : index
    %2 = vector.load %arg3[%c48, %c0_2] : memref<112x64xf32, #tpu.memory_space<vmem>>, vector<64x64xf32>
    %cst = arith.constant 1.000000e+00 : f32
    %3 = vector.broadcast %cst : f32 to vector<16x32xf32>
    %c0_3 = arith.constant 0 : index
    %c0_4 = arith.constant 0 : index
    %4 = vector.load %arg4[%c0_3, %c0_4] : memref<8x128xf32, #tpu.memory_space<vmem>>, vector<1x32xf32>
    %c0_5 = arith.constant 0 : index
    %c32 = arith.constant 32 : index
    %5 = vector.load %arg4[%c0_5, %c32] : memref<8x128xf32, #tpu.memory_space<vmem>>, vector<1x32xf32>
    %c0_6 = arith.constant 0 : index
    %c0_7 = arith.constant 0 : index
    %6 = vector.load %arg0[%c0_6, %c0_7] : memref<16x128xbf16, #tpu.memory_space<vmem>>, vector<16x128xbf16>
    %c0_8 = arith.constant 0 : index
    %c0_9 = arith.constant 0 : index
    %7 = vector.load %arg2[%c0_8, %c0_9] : memref<384x32xbf16, #tpu.memory_space<vmem>>, vector<128x32xbf16>
    %cst_10 = arith.constant dense<0.000000e+00> : vector<16x32xf32>
    %8 = tpu.matmul %6, %7, %cst_10 {dimension_numbers = #tpu.dot_dimension_numbers<[1], [0], [0], [1], [0, 0, 1, 1], [], []>} : vector<16x128xbf16>, vector<128x32xbf16>, vector<16x32xf32> -> vector<16x32xf32>
    %cst_11 = arith.constant dense<0.000000e+00> : vector<16xf32>
    %9 = vector.multi_reduction <add>, %8, %cst_11 [1] : vector<16x32xf32> to vector<16xf32>
    %10 = vector.shape_cast %9 : vector<16xf32> to vector<16x1xf32>
    %cst_12 = arith.constant 3.200000e+01 : f32
    %11 = vector.broadcast %cst_12 : f32 to vector<16x1xf32>
    %12 = arith.divf %10, %11 : vector<16x1xf32>
    %13 = vector.broadcast %12 : vector<16x1xf32> to vector<16x32xf32>
    %14 = arith.subf %8, %13 : vector<16x32xf32>
    %15 = arith.mulf %14, %14 : vector<16x32xf32>
    %cst_13 = arith.constant dense<0.000000e+00> : vector<16xf32>
    %16 = vector.multi_reduction <add>, %15, %cst_13 [1] : vector<16x32xf32> to vector<16xf32>
    %17 = vector.shape_cast %16 : vector<16xf32> to vector<16x1xf32>
    %cst_14 = arith.constant 3.200000e+01 : f32
    %18 = vector.broadcast %cst_14 : f32 to vector<16x1xf32>
    %19 = arith.divf %17, %18 : vector<16x1xf32>
    %cst_15 = arith.constant 9.99999974E-6 : f32
    %20 = vector.broadcast %cst_15 : f32 to vector<16x1xf32>
    %21 = arith.addf %19, %20 : vector<16x1xf32>
    %22 = math.rsqrt %21 : vector<16x1xf32>
    %23 = vector.broadcast %22 : vector<16x1xf32> to vector<16x32xf32>
    %24 = arith.mulf %14, %23 : vector<16x32xf32>
    %25 = vector.broadcast %4 : vector<1x32xf32> to vector<16x32xf32>
    %26 = arith.mulf %24, %25 : vector<16x32xf32>
    %27 = vector.broadcast %5 : vector<1x32xf32> to vector<16x32xf32>
    %28 = arith.addf %26, %27 : vector<16x32xf32>
    %c1 = arith.constant 1 : index
    %c0_16 = arith.constant 0 : index
    %29 = vector.load %arg4[%c1, %c0_16] : memref<8x128xf32, #tpu.memory_space<vmem>>, vector<1x32xf32>
    %c1_17 = arith.constant 1 : index
    %c32_18 = arith.constant 32 : index
    %30 = vector.load %arg4[%c1_17, %c32_18] : memref<8x128xf32, #tpu.memory_space<vmem>>, vector<1x32xf32>
    %c1_19 = arith.constant 1 : index
    %c64 = arith.constant 64 : index
    %31 = vector.load %arg4[%c1_19, %c64] : memref<8x128xf32, #tpu.memory_space<vmem>>, vector<1x32xf32>
    %c1_20 = arith.constant 1 : index
    %c96 = arith.constant 96 : index
    %32 = vector.load %arg4[%c1_20, %c96] : memref<8x128xf32, #tpu.memory_space<vmem>>, vector<1x32xf32>
    %c2 = arith.constant 2 : index
    %c0_21 = arith.constant 0 : index
    %33 = vector.load %arg4[%c2, %c0_21] : memref<8x128xf32, #tpu.memory_space<vmem>>, vector<1x32xf32>
    %c2_22 = arith.constant 2 : index
    %c32_23 = arith.constant 32 : index
    %34 = vector.load %arg4[%c2_22, %c32_23] : memref<8x128xf32, #tpu.memory_space<vmem>>, vector<1x32xf32>
    %c3 = arith.constant 3 : index
    %c0_24 = arith.constant 0 : index
    %35 = vector.load %arg4[%c3, %c0_24] : memref<8x128xf32, #tpu.memory_space<vmem>>, vector<1x128xf32>
    %c0_25 = arith.constant 0 : index
    %c0_26 = arith.constant 0 : index
    %36 = vector.load %arg1[%c0_25, %c0_26] : memref<160x128xbf16, #tpu.memory_space<vmem>>, vector<32x128xbf16>
    %c32_27 = arith.constant 32 : index
    %c0_28 = arith.constant 0 : index
    %37 = vector.load %arg1[%c32_27, %c0_28] : memref<160x128xbf16, #tpu.memory_space<vmem>>, vector<32x128xbf16>
    %c128 = arith.constant 128 : index
    %c0_29 = arith.constant 0 : index
    %38 = vector.load %arg2[%c128, %c0_29] : memref<384x32xbf16, #tpu.memory_space<vmem>>, vector<128x32xbf16>
    %cst_30 = arith.constant dense<0.000000e+00> : vector<16xf32>
    %39 = vector.multi_reduction <add>, %28, %cst_30 [1] : vector<16x32xf32> to vector<16xf32>
    %40 = vector.shape_cast %39 : vector<16xf32> to vector<16x1xf32>
    %cst_31 = arith.constant 3.200000e+01 : f32
    %41 = vector.broadcast %cst_31 : f32 to vector<16x1xf32>
    %42 = arith.divf %40, %41 : vector<16x1xf32>
    %43 = vector.broadcast %42 : vector<16x1xf32> to vector<16x32xf32>
    %44 = arith.subf %28, %43 : vector<16x32xf32>
    %45 = arith.mulf %44, %44 : vector<16x32xf32>
    %cst_32 = arith.constant dense<0.000000e+00> : vector<16xf32>
    %46 = vector.multi_reduction <add>, %45, %cst_32 [1] : vector<16x32xf32> to vector<16xf32>
    %47 = vector.shape_cast %46 : vector<16xf32> to vector<16x1xf32>
    %cst_33 = arith.constant 3.200000e+01 : f32
    %48 = vector.broadcast %cst_33 : f32 to vector<16x1xf32>
    %49 = arith.divf %47, %48 : vector<16x1xf32>
    %cst_34 = arith.constant 9.99999974E-6 : f32
    %50 = vector.broadcast %cst_34 : f32 to vector<16x1xf32>
    %51 = arith.addf %49, %50 : vector<16x1xf32>
    %52 = math.rsqrt %51 : vector<16x1xf32>
    %53 = vector.broadcast %52 : vector<16x1xf32> to vector<16x32xf32>
    %54 = arith.mulf %44, %53 : vector<16x32xf32>
    %55 = vector.broadcast %29 : vector<1x32xf32> to vector<16x32xf32>
    %56 = arith.mulf %54, %55 : vector<16x32xf32>
    %57 = vector.broadcast %30 : vector<1x32xf32> to vector<16x32xf32>
    %58 = arith.addf %56, %57 : vector<16x32xf32>
    %59 = arith.truncf %58 : vector<16x32xf32> to vector<16x32xbf16>
    %cst_35 = arith.constant dense<0.000000e+00> : vector<16x128xf32>
    %60 = tpu.matmul %59, %36, %cst_35 {dimension_numbers = #tpu.dot_dimension_numbers<[1], [0], [0], [1], [0, 0, 1, 1], [], []>} : vector<16x32xbf16>, vector<32x128xbf16>, vector<16x128xf32> -> vector<16x128xf32>
    %61 = vector.extract_strided_slice %60 {offsets = [0, 0], sizes = [16, 32], strides = [1, 1]} : vector<16x128xf32> to vector<16x32xf32>
    %62 = vector.extract_strided_slice %60 {offsets = [0, 32], sizes = [16, 32], strides = [1, 1]} : vector<16x128xf32> to vector<16x32xf32>
    %63 = vector.extract_strided_slice %60 {offsets = [0, 64], sizes = [16, 32], strides = [1, 1]} : vector<16x128xf32> to vector<16x32xf32>
    %64 = tpu.transpose %62, [1, 0] : vector<16x32xf32> -> vector<32x16xf32>
    %65 = tpu.concatenate %64, %64, %64, %64 in 1 : vector<32x16xf32>, vector<32x16xf32>, vector<32x16xf32>, vector<32x16xf32> -> vector<32x64xf32>
    %66 = arith.mulf %65, %1 : vector<32x64xf32>
    %cst_36 = arith.constant dense<0.000000e+00> : vector<16x64xf32>
    %67 = tpu.matmul %61, %66, %cst_36 {dimension_numbers = #tpu.dot_dimension_numbers<[1], [0], [0], [1], [0, 0, 1, 1], [], []>} : vector<16x32xf32>, vector<32x64xf32>, vector<16x64xf32> -> vector<16x64xf32>
    %68 = arith.addf %67, %0 : vector<16x64xf32>
    %cst_37 = arith.constant dense<0xFF800000> : vector<16xf32>
    %69 = vector.multi_reduction <maximumf>, %68, %cst_37 [1] : vector<16x64xf32> to vector<16xf32>
    %70 = vector.shape_cast %69 : vector<16xf32> to vector<16x1xf32>
    %71 = vector.broadcast %70 : vector<16x1xf32> to vector<16x64xf32>
    %72 = arith.subf %68, %71 : vector<16x64xf32>
    %73 = math.exp %72 : vector<16x64xf32>
    %74 = tpu.concatenate %63, %3 in 1 : vector<16x32xf32>, vector<16x32xf32> -> vector<16x64xf32>
    %75 = tpu.concatenate %74, %74, %74, %74 in 0 : vector<16x64xf32>, vector<16x64xf32>, vector<16x64xf32>, vector<16x64xf32> -> vector<64x64xf32>
    %76 = arith.mulf %75, %2 : vector<64x64xf32>
    %cst_38 = arith.constant dense<0.000000e+00> : vector<16x64xf32>
    %77 = tpu.matmul %73, %76, %cst_38 {dimension_numbers = #tpu.dot_dimension_numbers<[1], [0], [0], [1], [0, 0, 1, 1], [], []>} : vector<16x64xf32>, vector<64x64xf32>, vector<16x64xf32> -> vector<16x64xf32>
    %78 = vector.extract_strided_slice %77 {offsets = [0, 0], sizes = [16, 32], strides = [1, 1]} : vector<16x64xf32> to vector<16x32xf32>
    %79 = vector.extract_strided_slice %77 {offsets = [0, 32], sizes = [16, 32], strides = [1, 1]} : vector<16x64xf32> to vector<16x32xf32>
    %cst_39 = arith.constant 1.000000e-30 : f32
    %80 = vector.broadcast %cst_39 : f32 to vector<16x32xf32>
    %81 = arith.addf %79, %80 : vector<16x32xf32>
    %82 = tpu.reciprocal %81 {approx = true} : vector<16x32xf32> -> vector<16x32xf32>
    %83 = arith.mulf %78, %82 : vector<16x32xf32>
    %84 = arith.truncf %83 : vector<16x32xf32> to vector<16x32xbf16>
    %85 = vector.extract_strided_slice %36 {offsets = [0, 96], sizes = [32, 32], strides = [1, 1]} : vector<32x128xbf16> to vector<32x32xbf16>
    %cst_40 = arith.constant dense<0.000000e+00> : vector<16x32xf32>
    %86 = tpu.matmul %84, %85, %cst_40 {dimension_numbers = #tpu.dot_dimension_numbers<[1], [0], [0], [1], [0, 0, 1, 1], [], []>} : vector<16x32xbf16>, vector<32x32xbf16>, vector<16x32xf32> -> vector<16x32xf32>
    %87 = vector.broadcast %33 : vector<1x32xf32> to vector<16x32xf32>
    %88 = arith.addf %86, %87 : vector<16x32xf32>
    %89 = arith.addf %28, %88 : vector<16x32xf32>
    %cst_41 = arith.constant dense<0.000000e+00> : vector<16xf32>
    %90 = vector.multi_reduction <add>, %89, %cst_41 [1] : vector<16x32xf32> to vector<16xf32>
    %91 = vector.shape_cast %90 : vector<16xf32> to vector<16x1xf32>
    %cst_42 = arith.constant 3.200000e+01 : f32
    %92 = vector.broadcast %cst_42 : f32 to vector<16x1xf32>
    %93 = arith.divf %91, %92 : vector<16x1xf32>
    %94 = vector.broadcast %93 : vector<16x1xf32> to vector<16x32xf32>
    %95 = arith.subf %89, %94 : vector<16x32xf32>
    %96 = arith.mulf %95, %95 : vector<16x32xf32>
    %cst_43 = arith.constant dense<0.000000e+00> : vector<16xf32>
    %97 = vector.multi_reduction <add>, %96, %cst_43 [1] : vector<16x32xf32> to vector<16xf32>
    %98 = vector.shape_cast %97 : vector<16xf32> to vector<16x1xf32>
    %cst_44 = arith.constant 3.200000e+01 : f32
    %99 = vector.broadcast %cst_44 : f32 to vector<16x1xf32>
    %100 = arith.divf %98, %99 : vector<16x1xf32>
    %cst_45 = arith.constant 9.99999974E-6 : f32
    %101 = vector.broadcast %cst_45 : f32 to vector<16x1xf32>
    %102 = arith.addf %100, %101 : vector<16x1xf32>
    %103 = math.rsqrt %102 : vector<16x1xf32>
    %104 = vector.broadcast %103 : vector<16x1xf32> to vector<16x32xf32>
    %105 = arith.mulf %95, %104 : vector<16x32xf32>
    %106 = vector.broadcast %31 : vector<1x32xf32> to vector<16x32xf32>
    %107 = arith.mulf %105, %106 : vector<16x32xf32>
    %108 = vector.broadcast %32 : vector<1x32xf32> to vector<16x32xf32>
    %109 = arith.addf %107, %108 : vector<16x32xf32>
    %110 = arith.truncf %109 : vector<16x32xf32> to vector<16x32xbf16>
    %cst_46 = arith.constant dense<0.000000e+00> : vector<16x128xf32>
    %111 = tpu.matmul %110, %37, %cst_46 {dimension_numbers = #tpu.dot_dimension_numbers<[1], [0], [0], [1], [0, 0, 1, 1], [], []>} : vector<16x32xbf16>, vector<32x128xbf16>, vector<16x128xf32> -> vector<16x128xf32>
    %112 = vector.broadcast %35 : vector<1x128xf32> to vector<16x128xf32>
    %113 = arith.addf %111, %112 : vector<16x128xf32>
    %cst_47 = arith.constant 0.000000e+00 : f32
    %114 = vector.broadcast %cst_47 : f32 to vector<16x128xf32>
    %115 = arith.maximumf %113, %114 : vector<16x128xf32>
    %116 = arith.truncf %115 : vector<16x128xf32> to vector<16x128xbf16>
    %cst_48 = arith.constant dense<0.000000e+00> : vector<16x32xf32>
    %117 = tpu.matmul %116, %38, %cst_48 {dimension_numbers = #tpu.dot_dimension_numbers<[1], [0], [0], [1], [0, 0, 1, 1], [], []>} : vector<16x128xbf16>, vector<128x32xbf16>, vector<16x32xf32> -> vector<16x32xf32>
    %118 = vector.broadcast %34 : vector<1x32xf32> to vector<16x32xf32>
    %119 = arith.addf %117, %118 : vector<16x32xf32>
    %120 = arith.addf %89, %119 : vector<16x32xf32>
    %c4 = arith.constant 4 : index
    %c0_49 = arith.constant 0 : index
    %121 = vector.load %arg4[%c4, %c0_49] : memref<8x128xf32, #tpu.memory_space<vmem>>, vector<1x32xf32>
    %c4_50 = arith.constant 4 : index
    %c32_51 = arith.constant 32 : index
    %122 = vector.load %arg4[%c4_50, %c32_51] : memref<8x128xf32, #tpu.memory_space<vmem>>, vector<1x32xf32>
    %c4_52 = arith.constant 4 : index
    %c64_53 = arith.constant 64 : index
    %123 = vector.load %arg4[%c4_52, %c64_53] : memref<8x128xf32, #tpu.memory_space<vmem>>, vector<1x32xf32>
    %c4_54 = arith.constant 4 : index
    %c96_55 = arith.constant 96 : index
    %124 = vector.load %arg4[%c4_54, %c96_55] : memref<8x128xf32, #tpu.memory_space<vmem>>, vector<1x32xf32>
    %c5 = arith.constant 5 : index
    %c0_56 = arith.constant 0 : index
    %125 = vector.load %arg4[%c5, %c0_56] : memref<8x128xf32, #tpu.memory_space<vmem>>, vector<1x32xf32>
    %c5_57 = arith.constant 5 : index
    %c32_58 = arith.constant 32 : index
    %126 = vector.load %arg4[%c5_57, %c32_58] : memref<8x128xf32, #tpu.memory_space<vmem>>, vector<1x32xf32>
    %c6 = arith.constant 6 : index
    %c0_59 = arith.constant 0 : index
    %127 = vector.load %arg4[%c6, %c0_59] : memref<8x128xf32, #tpu.memory_space<vmem>>, vector<1x128xf32>
    %c64_60 = arith.constant 64 : index
    %c0_61 = arith.constant 0 : index
    %128 = vector.load %arg1[%c64_60, %c0_61] : memref<160x128xbf16, #tpu.memory_space<vmem>>, vector<32x128xbf16>
    %c96_62 = arith.constant 96 : index
    %c0_63 = arith.constant 0 : index
    %129 = vector.load %arg1[%c96_62, %c0_63] : memref<160x128xbf16, #tpu.memory_space<vmem>>, vector<32x128xbf16>
    %c256 = arith.constant 256 : index
    %c0_64 = arith.constant 0 : index
    %130 = vector.load %arg2[%c256, %c0_64] : memref<384x32xbf16, #tpu.memory_space<vmem>>, vector<128x32xbf16>
    %cst_65 = arith.constant dense<0.000000e+00> : vector<16xf32>
    %131 = vector.multi_reduction <add>, %120, %cst_65 [1] : vector<16x32xf32> to vector<16xf32>
    %132 = vector.shape_cast %131 : vector<16xf32> to vector<16x1xf32>
    %cst_66 = arith.constant 3.200000e+01 : f32
    %133 = vector.broadcast %cst_66 : f32 to vector<16x1xf32>
    %134 = arith.divf %132, %133 : vector<16x1xf32>
    %135 = vector.broadcast %134 : vector<16x1xf32> to vector<16x32xf32>
    %136 = arith.subf %120, %135 : vector<16x32xf32>
    %137 = arith.mulf %136, %136 : vector<16x32xf32>
    %cst_67 = arith.constant dense<0.000000e+00> : vector<16xf32>
    %138 = vector.multi_reduction <add>, %137, %cst_67 [1] : vector<16x32xf32> to vector<16xf32>
    %139 = vector.shape_cast %138 : vector<16xf32> to vector<16x1xf32>
    %cst_68 = arith.constant 3.200000e+01 : f32
    %140 = vector.broadcast %cst_68 : f32 to vector<16x1xf32>
    %141 = arith.divf %139, %140 : vector<16x1xf32>
    %cst_69 = arith.constant 9.99999974E-6 : f32
    %142 = vector.broadcast %cst_69 : f32 to vector<16x1xf32>
    %143 = arith.addf %141, %142 : vector<16x1xf32>
    %144 = math.rsqrt %143 : vector<16x1xf32>
    %145 = vector.broadcast %144 : vector<16x1xf32> to vector<16x32xf32>
    %146 = arith.mulf %136, %145 : vector<16x32xf32>
    %147 = vector.broadcast %121 : vector<1x32xf32> to vector<16x32xf32>
    %148 = arith.mulf %146, %147 : vector<16x32xf32>
    %149 = vector.broadcast %122 : vector<1x32xf32> to vector<16x32xf32>
    %150 = arith.addf %148, %149 : vector<16x32xf32>
    %151 = arith.truncf %150 : vector<16x32xf32> to vector<16x32xbf16>
    %cst_70 = arith.constant dense<0.000000e+00> : vector<16x128xf32>
    %152 = tpu.matmul %151, %128, %cst_70 {dimension_numbers = #tpu.dot_dimension_numbers<[1], [0], [0], [1], [0, 0, 1, 1], [], []>} : vector<16x32xbf16>, vector<32x128xbf16>, vector<16x128xf32> -> vector<16x128xf32>
    %153 = vector.extract_strided_slice %152 {offsets = [0, 0], sizes = [16, 32], strides = [1, 1]} : vector<16x128xf32> to vector<16x32xf32>
    %154 = vector.extract_strided_slice %152 {offsets = [0, 32], sizes = [16, 32], strides = [1, 1]} : vector<16x128xf32> to vector<16x32xf32>
    %155 = vector.extract_strided_slice %152 {offsets = [0, 64], sizes = [16, 32], strides = [1, 1]} : vector<16x128xf32> to vector<16x32xf32>
    %156 = tpu.transpose %154, [1, 0] : vector<16x32xf32> -> vector<32x16xf32>
    %157 = tpu.concatenate %156, %156, %156, %156 in 1 : vector<32x16xf32>, vector<32x16xf32>, vector<32x16xf32>, vector<32x16xf32> -> vector<32x64xf32>
    %158 = arith.mulf %157, %1 : vector<32x64xf32>
    %cst_71 = arith.constant dense<0.000000e+00> : vector<16x64xf32>
    %159 = tpu.matmul %153, %158, %cst_71 {dimension_numbers = #tpu.dot_dimension_numbers<[1], [0], [0], [1], [0, 0, 1, 1], [], []>} : vector<16x32xf32>, vector<32x64xf32>, vector<16x64xf32> -> vector<16x64xf32>
    %160 = arith.addf %159, %0 : vector<16x64xf32>
    %cst_72 = arith.constant dense<0xFF800000> : vector<16xf32>
    %161 = vector.multi_reduction <maximumf>, %160, %cst_72 [1] : vector<16x64xf32> to vector<16xf32>
    %162 = vector.shape_cast %161 : vector<16xf32> to vector<16x1xf32>
    %163 = vector.broadcast %162 : vector<16x1xf32> to vector<16x64xf32>
    %164 = arith.subf %160, %163 : vector<16x64xf32>
    %165 = math.exp %164 : vector<16x64xf32>
    %166 = tpu.concatenate %155, %3 in 1 : vector<16x32xf32>, vector<16x32xf32> -> vector<16x64xf32>
    %167 = tpu.concatenate %166, %166, %166, %166 in 0 : vector<16x64xf32>, vector<16x64xf32>, vector<16x64xf32>, vector<16x64xf32> -> vector<64x64xf32>
    %168 = arith.mulf %167, %2 : vector<64x64xf32>
    %cst_73 = arith.constant dense<0.000000e+00> : vector<16x64xf32>
    %169 = tpu.matmul %165, %168, %cst_73 {dimension_numbers = #tpu.dot_dimension_numbers<[1], [0], [0], [1], [0, 0, 1, 1], [], []>} : vector<16x64xf32>, vector<64x64xf32>, vector<16x64xf32> -> vector<16x64xf32>
    %170 = vector.extract_strided_slice %169 {offsets = [0, 0], sizes = [16, 32], strides = [1, 1]} : vector<16x64xf32> to vector<16x32xf32>
    %171 = vector.extract_strided_slice %169 {offsets = [0, 32], sizes = [16, 32], strides = [1, 1]} : vector<16x64xf32> to vector<16x32xf32>
    %cst_74 = arith.constant 1.000000e-30 : f32
    %172 = vector.broadcast %cst_74 : f32 to vector<16x32xf32>
    %173 = arith.addf %171, %172 : vector<16x32xf32>
    %174 = tpu.reciprocal %173 {approx = true} : vector<16x32xf32> -> vector<16x32xf32>
    %175 = arith.mulf %170, %174 : vector<16x32xf32>
    %176 = arith.truncf %175 : vector<16x32xf32> to vector<16x32xbf16>
    %177 = vector.extract_strided_slice %128 {offsets = [0, 96], sizes = [32, 32], strides = [1, 1]} : vector<32x128xbf16> to vector<32x32xbf16>
    %cst_75 = arith.constant dense<0.000000e+00> : vector<16x32xf32>
    %178 = tpu.matmul %176, %177, %cst_75 {dimension_numbers = #tpu.dot_dimension_numbers<[1], [0], [0], [1], [0, 0, 1, 1], [], []>} : vector<16x32xbf16>, vector<32x32xbf16>, vector<16x32xf32> -> vector<16x32xf32>
    %179 = vector.broadcast %125 : vector<1x32xf32> to vector<16x32xf32>
    %180 = arith.addf %178, %179 : vector<16x32xf32>
    %181 = arith.addf %120, %180 : vector<16x32xf32>
    %cst_76 = arith.constant dense<0.000000e+00> : vector<16xf32>
    %182 = vector.multi_reduction <add>, %181, %cst_76 [1] : vector<16x32xf32> to vector<16xf32>
    %183 = vector.shape_cast %182 : vector<16xf32> to vector<16x1xf32>
    %cst_77 = arith.constant 3.200000e+01 : f32
    %184 = vector.broadcast %cst_77 : f32 to vector<16x1xf32>
    %185 = arith.divf %183, %184 : vector<16x1xf32>
    %186 = vector.broadcast %185 : vector<16x1xf32> to vector<16x32xf32>
    %187 = arith.subf %181, %186 : vector<16x32xf32>
    %188 = arith.mulf %187, %187 : vector<16x32xf32>
    %cst_78 = arith.constant dense<0.000000e+00> : vector<16xf32>
    %189 = vector.multi_reduction <add>, %188, %cst_78 [1] : vector<16x32xf32> to vector<16xf32>
    %190 = vector.shape_cast %189 : vector<16xf32> to vector<16x1xf32>
    %cst_79 = arith.constant 3.200000e+01 : f32
    %191 = vector.broadcast %cst_79 : f32 to vector<16x1xf32>
    %192 = arith.divf %190, %191 : vector<16x1xf32>
    %cst_80 = arith.constant 9.99999974E-6 : f32
    %193 = vector.broadcast %cst_80 : f32 to vector<16x1xf32>
    %194 = arith.addf %192, %193 : vector<16x1xf32>
    %195 = math.rsqrt %194 : vector<16x1xf32>
    %196 = vector.broadcast %195 : vector<16x1xf32> to vector<16x32xf32>
    %197 = arith.mulf %187, %196 : vector<16x32xf32>
    %198 = vector.broadcast %123 : vector<1x32xf32> to vector<16x32xf32>
    %199 = arith.mulf %197, %198 : vector<16x32xf32>
    %200 = vector.broadcast %124 : vector<1x32xf32> to vector<16x32xf32>
    %201 = arith.addf %199, %200 : vector<16x32xf32>
    %202 = arith.truncf %201 : vector<16x32xf32> to vector<16x32xbf16>
    %cst_81 = arith.constant dense<0.000000e+00> : vector<16x128xf32>
    %203 = tpu.matmul %202, %129, %cst_81 {dimension_numbers = #tpu.dot_dimension_numbers<[1], [0], [0], [1], [0, 0, 1, 1], [], []>} : vector<16x32xbf16>, vector<32x128xbf16>, vector<16x128xf32> -> vector<16x128xf32>
    %204 = vector.broadcast %127 : vector<1x128xf32> to vector<16x128xf32>
    %205 = arith.addf %203, %204 : vector<16x128xf32>
    %cst_82 = arith.constant 0.000000e+00 : f32
    %206 = vector.broadcast %cst_82 : f32 to vector<16x128xf32>
    %207 = arith.maximumf %205, %206 : vector<16x128xf32>
    %208 = arith.truncf %207 : vector<16x128xf32> to vector<16x128xbf16>
    %cst_83 = arith.constant dense<0.000000e+00> : vector<16x32xf32>
    %209 = tpu.matmul %208, %130, %cst_83 {dimension_numbers = #tpu.dot_dimension_numbers<[1], [0], [0], [1], [0, 0, 1, 1], [], []>} : vector<16x128xbf16>, vector<128x32xbf16>, vector<16x32xf32> -> vector<16x32xf32>
    %210 = vector.broadcast %126 : vector<1x32xf32> to vector<16x32xf32>
    %211 = arith.addf %209, %210 : vector<16x32xf32>
    %212 = arith.addf %181, %211 : vector<16x32xf32>
    %c128_84 = arith.constant 128 : index
    %c0_85 = arith.constant 0 : index
    %213 = vector.load %arg1[%c128_84, %c0_85] : memref<160x128xbf16, #tpu.memory_space<vmem>>, vector<32x128xbf16>
    %214 = arith.truncf %212 : vector<16x32xf32> to vector<16x32xbf16>
    %cst_86 = arith.constant dense<0.000000e+00> : vector<16x128xf32>
    %215 = tpu.matmul %214, %213, %cst_86 {dimension_numbers = #tpu.dot_dimension_numbers<[1], [0], [0], [1], [0, 0, 1, 1], [], []>} : vector<16x32xbf16>, vector<32x128xbf16>, vector<16x128xf32> -> vector<16x128xf32>
    %c0_87 = arith.constant 0 : index
    %c0_88 = arith.constant 0 : index
    %216 = vector.load %arg5[%c0_87, %c0_88] : memref<16x128xf32, #tpu.memory_space<vmem>>, vector<16x128xf32>
    tpu.vector_store %arg5[%c0_87, %c0_88], %215 {strides = array<i32>} : memref<16x128xf32, #tpu.memory_space<vmem>>, vector<16x128xf32>,
    return
  }
}

</mosaic_0001>

<llo_original>
// kernel: eq.2
$region0: #{eq.2}
  %s0 = inlined_call_operand.hbm [shape: s32[2,8], index: 0, kind: input, shape index: {}]
  %s1 = inlined_call_operand.vmem [shape: s32[16], index: 1, kind: output, shape index: {}]
  $region1: #{eq.2} parent=0
    #allocation0 [shape = 'u8[1024]{0}', space=vmem, size = 0x400, scoped, tag = 'operand span for operand 0']
    #allocation1 [shape = 's32[1]{0}', space=sflag, size = 0x4, scoped, tag = 'scoped memory for eq.2']
    #allocation2 [shape = 'u8[4096]{0}', space=vmem, size = 0x1000, scoped, tag = 'scoped mem for output reshape']
    #allocation3 [shape = 'u8[4096]{0}', space=vmem, size = 0x1000, scoped, tag = 'scoped mem for input reshape']
    %2 = vsyncpa [#allocation1], 0
    %s4 = ssub.s32 32, 32
    %5 = vsyncadd [#allocation1], %s4
    %s7 = sshll.u32 [#allocation0], 4
    %s8 = int_to_ptr.vmem [resolvable:$true] %s7
    %10 = dma.hbm_to_vmem [thread:$0]  %s0, 32, %s8, [#allocation1]
    %11 = dma.done [#allocation1], 32
    %s13 = sshll.u32 1, 2
    %s14 = ssub.s32 %s13, 1
    %v15 = vld [vmem:[#allocation0] sm:%s14]
    %16 = vst [vmem:[#allocation3] sm:%s14] %v15
    %v17 = vld [vmem:[#allocation3] sm:$0x1]
    %vm18 = vcmask 64512
    %19 = vst.msk [vmem:[#allocation2] sm:$0x1] %vm18, %v17
    %s20 = scalar_lea.vmem [#allocation3], 1
    %v21 = vld [vmem:[%s20] sm:$0x1]
    %22 = vrot.lane.b32.xlu0 %v21, 8
    %v23 = vpop.permute.xlu0 %22
    %vm24 = vcmask 130112
    %25 = vst.msk [vmem:[#allocation2] sm:$0x1] %vm24, %v23
    %s27 = sshll.u32 1, 1
    %s28 = ssub.s32 %s27, 1
    %v30 = vld [vmem:[#allocation2] sm:%s28]
    %s31 = sshll.u32 1, 1
    %s32 = ssub.s32 %s31, 1
    %33 = vst [vmem:[%s1] sm:%s32] %v30
    %34 = vsyncpa [#allocation1], 1

// kernel: transformer_forward.1
$region0: #{transformer_forward.1}
  #allocation0 [shape = 'u32[]', space=smem, size = 0x4, offset = 0x4, fixed_abs, tag = 'smem constant byte address 0x4 - core index']
  #allocation1 [shape = 'u32[144,128]{1,0:T(1,128)}', space=vmem, size = 0x12000, scoped, tag = 'internal scratch']
  %s0 = inlined_call_operand.vmem [shape: bf16[16,128], index: 0, kind: input, shape index: {}]
  %s1 = inlined_call_operand.vmem [shape: bf16[160,128], index: 1, kind: input, shape index: {}]
  %s2 = inlined_call_operand.vmem [shape: bf16[384,32], index: 2, kind: input, shape index: {}]
  %s3 = inlined_call_operand.vmem [shape: f32[112,64], index: 3, kind: input, shape index: {}]
  %s4 = inlined_call_operand.vmem [shape: f32[8,128], index: 4, kind: input, shape index: {}]
  %s5 = inlined_call_operand.vmem [shape: f32[16,128], index: 5, kind: output, shape index: {}]
  %s6 = sld [smem:[#allocation0]]
  $region30: #{transformer_forward.1} parent=0
    _
  %s8 = ssub.s32 1, %s6
  %s9 = scalar_select 0, %s8, %s6
  // Predicated region
  $region2: #{transformer_forward.1} parent=0 // pred_check
    _
  $region3: #{transformer_forward.1} parent=0 // pred_check_branch
    %11 = sbr.rel (0) target = $region5
  $region4: #{transformer_forward.1} parent=0 // pred_region
    _
  $region5: #{transformer_forward.1} parent=0 // pred_fallthru
    _
  // Predicated region
  $region6: #{transformer_forward.1} parent=0 // pred_check
    _
  $region7: #{transformer_forward.1} parent=0 // pred_check_branch
    %13 = sbr.rel (0) target = $region9
  $region8: #{transformer_forward.1} parent=0 // pred_region
    _
  $region9: #{transformer_forward.1} parent=0 // pred_fallthru
    _
  // Predicated region
  $region10: #{transformer_forward.1} parent=0 // pred_check
    _
  $region11: #{transformer_forward.1} parent=0 // pred_check_branch
    %15 = sbr.rel (0) target = $region13
  $region12: #{transformer_forward.1} parent=0 // pred_region
    _
  $region13: #{transformer_forward.1} parent=0 // pred_fallthru
    _
  // Predicated region
  $region14: #{transformer_forward.1} parent=0 // pred_check
    _
  $region15: #{transformer_forward.1} parent=0 // pred_check_branch
    %17 = sbr.rel (0) target = $region17
  $region16: #{transformer_forward.1} parent=0 // pred_region
    _
  $region17: #{transformer_forward.1} parent=0 // pred_fallthru
    _
  // Predicated region
  $region18: #{transformer_forward.1} parent=0 // pred_check
    _
  $region19: #{transformer_forward.1} parent=0 // pred_check_branch
    %19 = sbr.rel (0) target = $region21
  $region20: #{transformer_forward.1} parent=0 // pred_region
    _
  $region21: #{transformer_forward.1} parent=0 // pred_fallthru
    _
  %v21 = vld [vmem:[%s3] sm:$0xff]
  %v22 = vld [vmem:[%s3 + $0x8] sm:$0xff]
  %v23 = vld [vmem:[%s3 + $0x10] sm:$0xff]
  %v24 = vld [vmem:[%s3 + $0x18] sm:$0xff]
  %v25 = vld [vmem:[%s3 + $0x20] sm:$0xff]
  %v26 = vld [vmem:[%s3 + $0x28] sm:$0xff]
  %v27 = vld [vmem:[%s3 + $0x30] sm:$0xff]
  %v28 = vld [vmem:[%s3 + $0x38] sm:$0xff]
  %v29 = vld [vmem:[%s3 + $0x40] sm:$0xff]
  %v30 = vld [vmem:[%s3 + $0x48] sm:$0xff]
  %v31 = vld [vmem:[%s3 + $0x50] sm:$0xff]
  %v32 = vld [vmem:[%s3 + $0x58] sm:$0xff]
  %v33 = vld [vmem:[%s3 + $0x60] sm:$0xff]
  %v34 = vld [vmem:[%s3 + $0x68] sm:$0xff]
  %v35 = vld [vmem:[%s4] sm:$0x1]
  %v36 = vld [vmem:[%s0] sm:$0xf]
  %v37 = vld [vmem:[%s0 + $0x4] sm:$0xf]
  %v38 = vld [vmem:[%s2] sm:$0xf]
  %v39 = vld [vmem:[%s2 + $0x4] sm:$0xf]
  %v40 = vld [vmem:[%s2 + $0x8] sm:$0xf]
  %v41 = vld [vmem:[%s2 + $0xc] sm:$0xf]
  %v42 = vld [vmem:[%s2 + $0x10] sm:$0xf]
  %v43 = vld [vmem:[%s2 + $0x14] sm:$0xf]
  %v44 = vld [vmem:[%s2 + $0x18] sm:$0xf]
  %v45 = vld [vmem:[%s2 + $0x1c] sm:$0xf]
  %v46 = vld [vmem:[%s2 + $0x20] sm:$0xf]
  %v47 = vld [vmem:[%s2 + $0x24] sm:$0xf]
  %v48 = vld [vmem:[%s2 + $0x28] sm:$0xf]
  %v49 = vld [vmem:[%s2 + $0x2c] sm:$0xf]
  %v50 = vld [vmem:[%s2 + $0x30] sm:$0xf]
  %v51 = vld [vmem:[%s2 + $0x34] sm:$0xf]
  %v52 = vld [vmem:[%s2 + $0x38] sm:$0xf]
  %v53 = vld [vmem:[%s2 + $0x3c] sm:$0xf]
  %v56 = vunpack.c.l.b16 %v36
  %v57 = vunpack.c.l.b16 %v37
  %v58 = vpack.c.b16 %v57, %v56
  %v76 = vunpack.c.l.b16 %v38
  %v77 = vunpack.c.l.b16 %v39
  %v78 = vunpack.c.l.b16 %v40
  %v79 = vunpack.c.l.b16 %v41
  %v80 = vunpack.c.l.b16 %v42
  %v81 = vunpack.c.l.b16 %v43
  %v82 = vunpack.c.l.b16 %v44
  %v83 = vunpack.c.l.b16 %v45
  %v84 = vunpack.c.l.b16 %v46
  %v85 = vunpack.c.l.b16 %v47
  %v86 = vunpack.c.l.b16 %v48
  %v87 = vunpack.c.l.b16 %v49
  %v88 = vunpack.c.l.b16 %v50
  %v89 = vunpack.c.l.b16 %v51
  %v90 = vunpack.c.l.b16 %v52
  %v91 = vunpack.c.l.b16 %v53
  %v92 = vpack.c.b16 %v77, %v76
  %v93 = vpack.c.b16 %v79, %v78
  %v94 = vpack.c.b16 %v81, %v80
  %v95 = vpack.c.b16 %v83, %v82
  %v96 = vpack.c.b16 %v85, %v84
  %v97 = vpack.c.b16 %v87, %v86
  %v98 = vpack.c.b16 %v89, %v88
  %v99 = vpack.c.b16 %v91, %v90
  %108 = vmatprep.subr.bf16.mxu0 0
  %109 = vmatpush1.bf16.msra.mxu0 %v99
  %110 = vmatprep.subr.bf16.mxu0 0
  %111 = vmatpush1.bf16.msra.mxu0 %v98
  %112 = vmatprep.subr.bf16.mxu0 0
  %113 = vmatpush1.bf16.msra.mxu0 %v97
  %114 = vmatprep.subr.bf16.mxu0 0
  %115 = vmatpush1.bf16.msra.mxu0 %v96
  %116 = vmatprep.subr.bf16.mxu0 0
  %117 = vmatpush1.bf16.msra.mxu0 %v95
  %118 = vmatprep.subr.bf16.mxu0 0
  %119 = vmatpush1.bf16.msra.mxu0 %v94
  %120 = vmatprep.subr.bf16.mxu0 0
  %121 = vmatpush1.bf16.msra.mxu0 %v93
  %122 = vmatprep.subr.bf16.mxu0 0
  %123 = vmatpush1.bf16.msra.mxu0 %v92
  %124 = vmatprep.subr.bf16.mxu0 0
  %125 = vmatpush2.bf16.msra.mxu0 0
  %126 = vmatprep.subr.bf16.mxu0 0
  %127 = vmatpush2.bf16.msra.mxu0 0
  %128 = vmatprep.subr.bf16.mxu0 0
  %129 = vmatpush2.bf16.msra.mxu0 0
  %130 = vmatprep.subr.bf16.mxu0 0
  %131 = vmatpush2.bf16.msra.mxu0 0
  %132 = vmatprep.subr.bf16.mxu0 0
  %133 = vmatpush2.bf16.msra.mxu0 0
  %134 = vmatprep.subr.bf16.mxu0 0
  %135 = vmatpush2.bf16.msra.mxu0 0
  %136 = vmatprep.subr.bf16.mxu0 0
  %137 = vmatpush2.bf16.msra.mxu0 0
  %138 = vmatprep.subr.bf16.mxu0 0
  %139 = vmatpush2.bf16.msra.mxu0 0
  %140 = vmatprep.mubr.bf16.mxu0 0
  %141 = vmatmul.mubr.bf16.gmra.mxu0 %v58
  %v142 = vpop.f32.mrf.mxu0
  %v143 = vadd.f32 0.0, %v142
  %v144 = vpop.f32.mrf.mxu0
  %v145 = vpop.f32.mrf.mxu0
  %v146 = vadd.f32 0.0, %v145
  %v147 = vpop.f32.mrf.mxu0
  %148 = vdwg.mxu0
  %vm149 = vcmask 261120
  %v150 = vsel %vm149, %v143, 0.0
  %151 = vadd.xlane.f32.xlu0 %v150
  %v152 = vpop.xlane.xlu0 %151
  %v153 = vsel %vm149, %v146, 0.0
  %154 = vadd.xlane.f32.xlu0 %v153
  %v155 = vpop.xlane.xlu0 %154
  %v156 = vrcp.pop 32.0
  %v157 = vmul.f32 %v152, %v156
  %v158 = vmul.f32 %v155, %v156
  %v159 = vsub.f32 %v143, %v157
  %v160 = vsub.f32 %v146, %v158
  %v161 = vmul.f32 %v159, %v159
  %v162 = vmul.f32 %v160, %v160
  %v163 = vsel %vm149, %v161, 0.0
  %164 = vadd.xlane.f32.xlu0 %v163
  %v165 = vpop.xlane.xlu0 %164
  %v166 = vsel %vm149, %v162, 0.0
  %167 = vadd.xlane.f32.xlu0 %v166
  %v168 = vpop.xlane.xlu0 %167
  %v169 = vmul.f32 %v165, %v156
  %v170 = vmul.f32 %v168, %v156
  %v171 = vadd.f32 %v169, 1e-05
  %v172 = vadd.f32 %v170, 1e-05
  %v173 = vrsqrt.pop %v171
  %v174 = vrsqrt.pop %v172
  %v175 = vmul.f32 %v159, %v173
  %v176 = vmul.f32 %v160, %v174
  %v177 = vlaneseq
  %v178 = vshrl.u32 %v177, 7
  %v179 = vsub.s32 0, %v178
  %v180 = vrot.slane %v35, %v179
  %v181 = vmul.f32 %v175, %v180
  %v182 = vmul.f32 %v176, %v180
  %184 = vrot.lane.b32.xlu0 %v180, 96
  %v185 = vpop.permute.xlu0 %184
  %v187 = vadd.f32 %v181, %v185
  %v188 = vadd.f32 %v182, %v185
  %v189 = vld [vmem:[%s4 + $0x1] sm:$0x1]
  %v190 = vld [vmem:[%s4 + $0x2] sm:$0x1]
  %v191 = vld [vmem:[%s4 + $0x3] sm:$0x1]
  %v192 = vld [vmem:[%s1] sm:$0xf]
  %v193 = vld [vmem:[%s1 + $0x4] sm:$0xf]
  %v194 = vld [vmem:[%s1 + $0x8] sm:$0xf]
  %v195 = vld [vmem:[%s1 + $0xc] sm:$0xf]
  %v196 = vld [vmem:[%s1 + $0x10] sm:$0xf]
  %v197 = vld [vmem:[%s1 + $0x14] sm:$0xf]
  %v198 = vld [vmem:[%s1 + $0x18] sm:$0xf]
  %v199 = vld [vmem:[%s1 + $0x1c] sm:$0xf]
  %v200 = vld [vmem:[%s2 + $0x40] sm:$0xf]
  %v201 = vld [vmem:[%s2 + $0x44] sm:$0xf]
  %v202 = vld [vmem:[%s2 + $0x48] sm:$0xf]
  %v203 = vld [vmem:[%s2 + $0x4c] sm:$0xf]
  %v204 = vld [vmem:[%s2 + $0x50] sm:$0xf]
  %v205 = vld [vmem:[%s2 + $0x54] sm:$0xf]
  %v206 = vld [vmem:[%s2 + $0x58] sm:$0xf]
  %v207 = vld [vmem:[%s2 + $0x5c] sm:$0xf]
  %v208 = vld [vmem:[%s2 + $0x60] sm:$0xf]
  %v209 = vld [vmem:[%s2 + $0x64] sm:$0xf]
  %v210 = vld [vmem:[%s2 + $0x68] sm:$0xf]
  %v211 = vld [vmem:[%s2 + $0x6c] sm:$0xf]
  %v212 = vld [vmem:[%s2 + $0x70] sm:$0xf]
  %v213 = vld [vmem:[%s2 + $0x74] sm:$0xf]
  %v214 = vld [vmem:[%s2 + $0x78] sm:$0xf]
  %v215 = vld [vmem:[%s2 + $0x7c] sm:$0xf]
  %v216 = vsel %vm149, %v187, 0.0
  %217 = vadd.xlane.f32.xlu0 %v216
  %v218 = vpop.xlane.xlu0 %217
  %v219 = vsel %vm149, %v188, 0.0
  %220 = vadd.xlane.f32.xlu0 %v219
  %v221 = vpop.xlane.xlu0 %220
  %v222 = vmul.f32 %v218, %v156
  %v223 = vmul.f32 %v221, %v156
  %v224 = vsub.f32 %v187, %v222
  %v225 = vsub.f32 %v188, %v223
  %v226 = vmul.f32 %v224, %v224
  %v227 = vmul.f32 %v225, %v225
  %v228 = vsel %vm149, %v226, 0.0
  %229 = vadd.xlane.f32.xlu0 %v228
  %v230 = vpop.xlane.xlu0 %229
  %v231 = vsel %vm149, %v227, 0.0
  %232 = vadd.xlane.f32.xlu0 %v231
  %v233 = vpop.xlane.xlu0 %232
  %v234 = vmul.f32 %v230, %v156
  %v235 = vmul.f32 %v233, %v156
  %v236 = vadd.f32 %v234, 1e-05
  %v237 = vadd.f32 %v235, 1e-05
  %v238 = vrsqrt.pop %v236
  %v239 = vrsqrt.pop %v237
  %v240 = vmul.f32 %v224, %v238
  %v241 = vmul.f32 %v225, %v239
  %v242 = vlaneseq
  %v243 = vshrl.u32 %v242, 7
  %v244 = vsub.s32 0, %v243
  %v245 = vrot.slane %v189, %v244
  %v246 = vmul.f32 %v240, %v245
  %v247 = vmul.f32 %v241, %v245
  %249 = vrot.lane.b32.xlu0 %v245, 96
  %v250 = vpop.permute.xlu0 %249
  %v252 = vadd.f32 %v246, %v250
  %v253 = vadd.f32 %v247, %v250
  %v254 = vpack.c.bf16 %v253, %v252
  %v259 = vunpack.c.l.b16 %v192
  %v260 = vunpack.c.l.b16 %v193
  %v261 = vunpack.c.l.b16 %v194
  %v262 = vunpack.c.l.b16 %v195
  %v263 = vpack.c.b16 %v260, %v259
  %v264 = vpack.c.b16 %v262, %v261
  %v268 = vsel %vm149, %v254, 0
  %270 = vmatprep.subr.bf16.mxu0 0
  %271 = vmatpush1.bf16.msra.mxu0 0
  %272 = vmatprep.subr.bf16.mxu0 0
  %273 = vmatpush1.bf16.msra.mxu0 0
  %274 = vmatprep.subr.bf16.mxu0 0
  %275 = vmatpush1.bf16.msra.mxu0 0
  %276 = vmatprep.subr.bf16.mxu0 0
  %277 = vmatpush1.bf16.msra.mxu0 0
  %278 = vmatprep.subr.bf16.mxu0 0
  %279 = vmatpush1.bf16.msra.mxu0 0
  %280 = vmatprep.subr.bf16.mxu0 0
  %281 = vmatpush1.bf16.msra.mxu0 0
  %282 = vmatprep.subr.bf16.mxu0 0
  %283 = vmatpush1.bf16.msra.mxu0 %v264
  %284 = vmatprep.subr.bf16.mxu0 0
  %285 = vmatpush1.bf16.msra.mxu0 %v263
  %286 = vmatprep.subr.bf16.mxu0 0
  %287 = vmatpush2.bf16.msra.mxu0 0
  %288 = vmatprep.subr.bf16.mxu0 0
  %289 = vmatpush2.bf16.msra.mxu0 0
  %290 = vmatprep.subr.bf16.mxu0 0
  %291 = vmatpush2.bf16.msra.mxu0 0
  %292 = vmatprep.subr.bf16.mxu0 0
  %293 = vmatpush2.bf16.msra.mxu0 0
  %294 = vmatprep.subr.bf16.mxu0 0
  %295 = vmatpush2.bf16.msra.mxu0 0
  %296 = vmatprep.subr.bf16.mxu0 0
  %297 = vmatpush2.bf16.msra.mxu0 0
  %298 = vmatprep.subr.bf16.mxu0 0
  %299 = vmatpush2.bf16.msra.mxu0 0
  %300 = vmatprep.subr.bf16.mxu0 0
  %301 = vmatpush2.bf16.msra.mxu0 0
  %302 = vmatprep.mubr.bf16.mxu0 0
  %303 = vmatmul.mubr.bf16.gmra.mxu0 %v268
  %v304 = vpop.f32.mrf.mxu0
  %v305 = vadd.f32 0.0, %v304
  %v306 = vpop.f32.mrf.mxu0
  %v307 = vpop.f32.mrf.mxu0
  %v308 = vadd.f32 0.0, %v307
  %v309 = vpop.f32.mrf.mxu0
  %310 = vdwg.mxu0
  %313 = vrot.lane.b32.xlu0 %v305, 96
  %v314 = vpop.permute.xlu0 %313
  %315 = vrot.lane.b32.xlu0 %v308, 96
  %v316 = vpop.permute.xlu0 %315
  %319 = vxpose.xlu0.b32.start [1/16] %v314, 128
  %320 = vxpose.xlu0.b32.cont [2/16] %v316, 128
  %321 = vxpose.xlu0.b32.cont [3/16] 0.0, 128
  %322 = vxpose.xlu0.b32.cont [4/16] 0.0, 128
  %323 = vxpose.xlu0.b32.cont [5/16] 0.0, 128
  %324 = vxpose.xlu0.b32.cont [6/16] 0.0, 128
  %325 = vxpose.xlu0.b32.cont [7/16] 0.0, 128
  %326 = vxpose.xlu0.b32.cont [8/16] 0.0, 128
  %327 = vxpose.xlu0.b32.cont [9/16] 0.0, 128
  %328 = vxpose.xlu0.b32.cont [10/16] 0.0, 128
  %329 = vxpose.xlu0.b32.cont [11/16] 0.0, 128
  %330 = vxpose.xlu0.b32.cont [12/16] 0.0, 128
  %331 = vxpose.xlu0.b32.cont [13/16] 0.0, 128
  %332 = vxpose.xlu0.b32.cont [14/16] 0.0, 128
  %333 = vxpose.xlu0.b32.cont [15/16] 0.0, 128
  %334 = vxpose.xlu0.b32.end [16/16] 0.0, 128
  %v335 = vpop.trf.xlu0
  %v336 = vpop.trf.xlu0
  %v337 = vpop.trf.xlu0
  %v338 = vpop.trf.xlu0
  %v339 = vpop.trf.xlu0
  %v340 = vpop.trf.xlu0
  %v341 = vpop.trf.xlu0
  %v342 = vpop.trf.xlu0
  %v343 = vpop.trf.xlu0
  %v344 = vpop.trf.xlu0
  %v345 = vpop.trf.xlu0
  %v346 = vpop.trf.xlu0
  %v347 = vpop.trf.xlu0
  %v348 = vpop.trf.xlu0
  %v349 = vpop.trf.xlu0
  %v350 = vpop.trf.xlu0
  %355 = vrot.lane.b32.xlu0 %v335, 16
  %v356 = vpop.permute.xlu0 %355
  %357 = vrot.lane.b32.xlu0 %v336, 16
  %v358 = vpop.permute.xlu0 %357
  %359 = vrot.lane.b32.xlu0 %v337, 16
  %v360 = vpop.permute.xlu0 %359
  %361 = vrot.lane.b32.xlu0 %v338, 16
  %v362 = vpop.permute.xlu0 %361
  %367 = vrot.lane.b32.xlu0 %v335, 32
  %v368 = vpop.permute.xlu0 %367
  %369 = vrot.lane.b32.xlu0 %v336, 32
  %v370 = vpop.permute.xlu0 %369
  %371 = vrot.lane.b32.xlu0 %v337, 32
  %v372 = vpop.permute.xlu0 %371
  %373 = vrot.lane.b32.xlu0 %v338, 32
  %v374 = vpop.permute.xlu0 %373
  %379 = vrot.lane.b32.xlu0 %v335, 48
  %v380 = vpop.permute.xlu0 %379
  %381 = vrot.lane.b32.xlu0 %v336, 48
  %v382 = vpop.permute.xlu0 %381
  %383 = vrot.lane.b32.xlu0 %v337, 48
  %v384 = vpop.permute.xlu0 %383
  %385 = vrot.lane.b32.xlu0 %v338, 48
  %v386 = vpop.permute.xlu0 %385
  %vm391 = vcmask 130048
  %v392 = vsel %vm391, %v335, %v356
  %v393 = vsel %vm391, %v336, %v358
  %v394 = vsel %vm391, %v337, %v360
  %v395 = vsel %vm391, %v338, %v362
  %v396 = vsel %vm149, %v392, %v368
  %v397 = vsel %vm149, %v393, %v370
  %v398 = vsel %vm149, %v394, %v372
  %v399 = vsel %vm149, %v395, %v374
  %vm400 = vcmask 392192
  %v401 = vsel %vm400, %v396, %v380
  %v402 = vsel %vm400, %v397, %v382
  %v403 = vsel %vm400, %v398, %v384
  %v404 = vsel %vm400, %v399, %v386
  %v405 = vmul.f32 %v401, %v23
  %v406 = vmul.f32 %v402, %v24
  %v407 = vmul.f32 %v403, %v25
  %v408 = vmul.f32 %v404, %v26
  %v409 = vsel %vm149, %v305, 0
  %v411 = vsel %vm149, %v308, 0
  %413 = vmatprep.subr.mxu0 0.0
  %414 = vmatpush1.msra.mxu0 0.0
  %415 = vmatprep.subr.mxu0 0.0
  %416 = vmatpush1.msra.mxu0 0.0
  %417 = vmatprep.subr.mxu0 0.0
  %418 = vmatpush1.msra.mxu0 0.0
  %419 = vmatprep.subr.mxu0 0.0
  %420 = vmatpush1.msra.mxu0 0.0
  %421 = vmatprep.subr.mxu0 0.0
  %422 = vmatpush1.msra.mxu0 0.0
  %423 = vmatprep.subr.mxu0 0.0
  %424 = vmatpush1.msra.mxu0 0.0
  %425 = vmatprep.subr.mxu0 0.0
  %426 = vmatpush1.msra.mxu0 0.0
  %427 = vmatprep.subr.mxu0 0.0
  %428 = vmatpush1.msra.mxu0 0.0
  %429 = vmatprep.subr.mxu0 0.0
  %430 = vmatpush1.msra.mxu0 0.0
  %431 = vmatprep.subr.mxu0 0.0
  %432 = vmatpush1.msra.mxu0 0.0
  %433 = vmatprep.subr.mxu0 0.0
  %434 = vmatpush1.msra.mxu0 0.0
  %435 = vmatprep.subr.mxu0 0.0
  %436 = vmatpush1.msra.mxu0 0.0
  %437 = vmatprep.subr.mxu0 0.0
  %438 = vmatpush1.msra.mxu0 %v408
  %439 = vmatprep.subr.mxu0 0.0
  %440 = vmatpush1.msra.mxu0 %v407
  %441 = vmatprep.subr.mxu0 0.0
  %442 = vmatpush1.msra.mxu0 %v406
  %443 = vmatprep.subr.mxu0 0.0
  %444 = vmatpush1.msra.mxu0 %v405
  %445 = vmatprep.subr.mxu0 0.0
  %446 = vmatpush2.msra.mxu0 0.0
  %447 = vmatprep.subr.mxu0 0.0
  %448 = vmatpush2.msra.mxu0 0.0
  %449 = vmatprep.subr.mxu0 0.0
  %450 = vmatpush2.msra.mxu0 0.0
  %451 = vmatprep.subr.mxu0 0.0
  %452 = vmatpush2.msra.mxu0 0.0
  %453 = vmatprep.subr.mxu0 0.0
  %454 = vmatpush2.msra.mxu0 0.0
  %455 = vmatprep.subr.mxu0 0.0
  %456 = vmatpush2.msra.mxu0 0.0
  %457 = vmatprep.subr.mxu0 0.0
  %458 = vmatpush2.msra.mxu0 0.0
  %459 = vmatprep.subr.mxu0 0.0
  %460 = vmatpush2.msra.mxu0 0.0
  %461 = vmatprep.subr.mxu0 0.0
  %462 = vmatpush2.msra.mxu0 0.0
  %463 = vmatprep.subr.mxu0 0.0
  %464 = vmatpush2.msra.mxu0 0.0
  %465 = vmatprep.subr.mxu0 0.0
  %466 = vmatpush2.msra.mxu0 0.0
  %467 = vmatprep.subr.mxu0 0.0
  %468 = vmatpush2.msra.mxu0 0.0
  %469 = vmatprep.subr.mxu0 0.0
  %470 = vmatpush2.msra.mxu0 0.0
  %471 = vmatprep.subr.mxu0 0.0
  %472 = vmatpush2.msra.mxu0 0.0
  %473 = vmatprep.subr.mxu0 0.0
  %474 = vmatpush2.msra.mxu0 0.0
  %475 = vmatprep.subr.mxu0 0.0
  %476 = vmatpush2.msra.mxu0 0.0
  %477 = vmatprep.mubr.f32.mxu0 0.0
  %478 = vmatmul.mubr.f32.gmra.mxu0 %v409
  %v479 = vpop.f32.mrf.mxu0
  %v480 = vadd.f32 %v21, %v479
  %v481 = vpop.f32.mrf.mxu0
  %482 = vmatprep.mubr.f32.mxu0 0.0
  %483 = vmatmul.mubr.f32.gmra.mxu0 %v411
  %v484 = vpop.f32.mrf.mxu0
  %v485 = vadd.f32 %v22, %v484
  %v486 = vpop.f32.mrf.mxu0
  %487 = vdwg.mxu0
  %vm488 = vcmask 523264
  %v489 = vsel %vm488, %v480, -inf
  %490 = vmax.xlane.f32.xlu0 %v489
  %v491 = vpop.xlane.xlu0 %490
  %v492 = vsel %vm488, %v485, -inf
  %493 = vmax.xlane.f32.xlu0 %v492
  %v494 = vpop.xlane.xlu0 %493
  %v495 = vsub.f32 %v480, %v491
  %v496 = vsub.f32 %v485, %v494
  %v497 = vmul.f32 %v495, 1.442695
  %v498 = vpow.pop %v497
  %v499 = vmul.f32 %v496, 1.442695
  %v500 = vpow.pop %v499
  %501 = vrot.lane.b32.xlu0 %v305, 64
  %v502 = vpop.permute.xlu0 %501
  %503 = vrot.lane.b32.xlu0 %v308, 64
  %v504 = vpop.permute.xlu0 %503
  %v507 = vsel %vm149, %v502, 1.0
  %v508 = vsel %vm149, %v504, 1.0
  %v509 = vmul.f32 %v507, %v27
  %v510 = vmul.f32 %v508, %v28
  %v511 = vmul.f32 %v507, %v29
  %v512 = vmul.f32 %v508, %v30
  %v513 = vmul.f32 %v507, %v31
  %v514 = vmul.f32 %v508, %v32
  %v515 = vmul.f32 %v507, %v33
  %v516 = vmul.f32 %v508, %v34
  %v518 = vsel %vm488, %v498, 0
  %v521 = vsel %vm488, %v500, 0
  %523 = vmatprep.subr.mxu0 0.0
  %524 = vmatpush1.msra.mxu0 0.0
  %525 = vmatprep.subr.mxu0 0.0
  %526 = vmatpush1.msra.mxu0 0.0
  %527 = vmatprep.subr.mxu0 0.0
  %528 = vmatpush1.msra.mxu0 0.0
  %529 = vmatprep.subr.mxu0 0.0
  %530 = vmatpush1.msra.mxu0 0.0
  %531 = vmatprep.subr.mxu0 0.0
  %532 = vmatpush1.msra.mxu0 0.0
  %533 = vmatprep.subr.mxu0 0.0
  %534 = vmatpush1.msra.mxu0 0.0
  %535 = vmatprep.subr.mxu0 0.0
  %536 = vmatpush1.msra.mxu0 0.0
  %537 = vmatprep.subr.mxu0 0.0
  %538 = vmatpush1.msra.mxu0 0.0
  %539 = vmatprep.subr.mxu0 0.0
  %540 = vmatpush1.msra.mxu0 %v516
  %541 = vmatprep.subr.mxu0 0.0
  %542 = vmatpush1.msra.mxu0 %v515
  %543 = vmatprep.subr.mxu0 0.0
  %544 = vmatpush1.msra.mxu0 %v514
  %545 = vmatprep.subr.mxu0 0.0
  %546 = vmatpush1.msra.mxu0 %v513
  %547 = vmatprep.subr.mxu0 0.0
  %548 = vmatpush1.msra.mxu0 %v512
  %549 = vmatprep.subr.mxu0 0.0
  %550 = vmatpush1.msra.mxu0 %v511
  %551 = vmatprep.subr.mxu0 0.0
  %552 = vmatpush1.msra.mxu0 %v510
  %553 = vmatprep.subr.mxu0 0.0
  %554 = vmatpush1.msra.mxu0 %v509
  %555 = vmatprep.subr.mxu0 0.0
  %556 = vmatpush2.msra.mxu0 0.0
  %557 = vmatprep.subr.mxu0 0.0
  %558 = vmatpush2.msra.mxu0 0.0
  %559 = vmatprep.subr.mxu0 0.0
  %560 = vmatpush2.msra.mxu0 0.0
  %561 = vmatprep.subr.mxu0 0.0
  %562 = vmatpush2.msra.mxu0 0.0
  %563 = vmatprep.subr.mxu0 0.0
  %564 = vmatpush2.msra.mxu0 0.0
  %565 = vmatprep.subr.mxu0 0.0
  %566 = vmatpush2.msra.mxu0 0.0
  %567 = vmatprep.subr.mxu0 0.0
  %568 = vmatpush2.msra.mxu0 0.0
  %569 = vmatprep.subr.mxu0 0.0
  %570 = vmatpush2.msra.mxu0 0.0
  %571 = vmatprep.subr.mxu0 0.0
  %572 = vmatpush2.msra.mxu0 0.0
  %573 = vmatprep.subr.mxu0 0.0
  %574 = vmatpush2.msra.mxu0 0.0
  %575 = vmatprep.subr.mxu0 0.0
  %576 = vmatpush2.msra.mxu0 0.0
  %577 = vmatprep.subr.mxu0 0.0
  %578 = vmatpush2.msra.mxu0 0.0
  %579 = vmatprep.subr.mxu0 0.0
  %580 = vmatpush2.msra.mxu0 0.0
  %581 = vmatprep.subr.mxu0 0.0
  %582 = vmatpush2.msra.mxu0 0.0
  %583 = vmatprep.subr.mxu0 0.0
  %584 = vmatpush2.msra.mxu0 0.0
  %585 = vmatprep.subr.mxu0 0.0
  %586 = vmatpush2.msra.mxu0 0.0
  %587 = vmatprep.mubr.f32.mxu0 0.0
  %588 = vmatmul.mubr.f32.gmra.mxu0 %v518
  %v589 = vpop.f32.mrf.mxu0
  %v590 = vadd.f32 0.0, %v589
  %v591 = vpop.f32.mrf.mxu0
  %592 = vmatprep.mubr.f32.mxu0 0.0
  %593 = vmatmul.mubr.f32.gmra.mxu0 %v521
  %v594 = vpop.f32.mrf.mxu0
  %v595 = vadd.f32 0.0, %v594
  %v596 = vpop.f32.mrf.mxu0
  %597 = vdwg.mxu0
  %v598 = vadd.f32 %v590, 1e-30
  %v599 = vadd.f32 %v595, 1e-30
  %v600 = vrcp.pop %v598
  %v601 = vrcp.pop %v599
  %604 = vrot.lane.b32.xlu0 %v600, 96
  %v605 = vpop.permute.xlu0 %604
  %606 = vrot.lane.b32.xlu0 %v601, 96
  %v607 = vpop.permute.xlu0 %606
  %v610 = vmul.f32 %v590, %v605
  %v611 = vmul.f32 %v595, %v607
  %v612 = vpack.c.bf16 %v611, %v610
  %v613 = vlaneseq
  %v614 = vshrl.u32 %v613, 7
  %v615 = vsub.s32 0, %v614
  %v616 = vrot.slane %v190, %v615
  %617 = vrot.lane.b32.xlu0 %v263, 32
  %v618 = vpop.permute.xlu0 %617
  %619 = vrot.lane.b32.xlu0 %v264, 32
  %v620 = vpop.permute.xlu0 %619
  %v624 = vsel %vm149, %v612, 0
  %626 = vmatprep.subr.bf16.mxu0 0
  %627 = vmatpush1.bf16.msra.mxu0 0
  %628 = vmatprep.subr.bf16.mxu0 0
  %629 = vmatpush1.bf16.msra.mxu0 0
  %630 = vmatprep.subr.bf16.mxu0 0
  %631 = vmatpush1.bf16.msra.mxu0 0
  %632 = vmatprep.subr.bf16.mxu0 0
  %633 = vmatpush1.bf16.msra.mxu0 0
  %634 = vmatprep.subr.bf16.mxu0 0
  %635 = vmatpush1.bf16.msra.mxu0 0
  %636 = vmatprep.subr.bf16.mxu0 0
  %637 = vmatpush1.bf16.msra.mxu0 0
  %638 = vmatprep.subr.bf16.mxu0 0
  %639 = vmatpush1.bf16.msra.mxu0 %v620
  %640 = vmatprep.subr.bf16.mxu0 0
  %641 = vmatpush1.bf16.msra.mxu0 %v618
  %642 = vmatprep.subr.bf16.mxu0 0
  %643 = vmatpush2.bf16.msra.mxu0 0
  %644 = vmatprep.subr.bf16.mxu0 0
  %645 = vmatpush2.bf16.msra.mxu0 0
  %646 = vmatprep.subr.bf16.mxu0 0
  %647 = vmatpush2.bf16.msra.mxu0 0
  %648 = vmatprep.subr.bf16.mxu0 0
  %649 = vmatpush2.bf16.msra.mxu0 0
  %650 = vmatprep.subr.bf16.mxu0 0
  %651 = vmatpush2.bf16.msra.mxu0 0
  %652 = vmatprep.subr.bf16.mxu0 0
  %653 = vmatpush2.bf16.msra.mxu0 0
  %654 = vmatprep.subr.bf16.mxu0 0
  %655 = vmatpush2.bf16.msra.mxu0 0
  %656 = vmatprep.subr.bf16.mxu0 0
  %657 = vmatpush2.bf16.msra.mxu0 0
  %658 = vmatprep.mubr.bf16.mxu0 0
  %659 = vmatmul.mubr.bf16.gmra.mxu0 %v624
  %v660 = vpop.f32.mrf.mxu0
  %v661 = vadd.f32 %v616, %v660
  %v662 = vpop.f32.mrf.mxu0
  %v663 = vpop.f32.mrf.mxu0
  %v664 = vadd.f32 %v616, %v663
  %v665 = vpop.f32.mrf.mxu0
  %666 = vdwg.mxu0
  %v667 = vadd.f32 %v187, %v661
  %v668 = vadd.f32 %v188, %v664
  %v669 = vsel %vm149, %v667, 0.0
  %670 = vadd.xlane.f32.xlu0 %v669
  %v671 = vpop.xlane.xlu0 %670
  %v672 = vsel %vm149, %v668, 0.0
  %673 = vadd.xlane.f32.xlu0 %v672
  %v674 = vpop.xlane.xlu0 %673
  %v675 = vmul.f32 %v671, %v156
  %v676 = vmul.f32 %v674, %v156
  %v677 = vsub.f32 %v667, %v675
  %v678 = vsub.f32 %v668, %v676
  %v679 = vmul.f32 %v677, %v677
  %v680 = vmul.f32 %v678, %v678
  %v681 = vsel %vm149, %v679, 0.0
  %682 = vadd.xlane.f32.xlu0 %v681
  %v683 = vpop.xlane.xlu0 %682
  %v684 = vsel %vm149, %v680, 0.0
  %685 = vadd.xlane.f32.xlu0 %v684
  %v686 = vpop.xlane.xlu0 %685
  %v687 = vmul.f32 %v683, %v156
  %v688 = vmul.f32 %v686, %v156
  %v689 = vadd.f32 %v687, 1e-05
  %v690 = vadd.f32 %v688, 1e-05
  %v691 = vrsqrt.pop %v689
  %v692 = vrsqrt.pop %v690
  %v693 = vmul.f32 %v677, %v691
  %v694 = vmul.f32 %v678, %v692
  %695 = vrot.lane.b32.xlu0 %v245, 64
  %v696 = vpop.permute.xlu0 %695
  %v698 = vmul.f32 %v693, %v696
  %v699 = vmul.f32 %v694, %v696
  %700 = vrot.lane.b32.xlu0 %v245, 32
  %v701 = vpop.permute.xlu0 %700
  %v703 = vadd.f32 %v698, %v701
  %v704 = vadd.f32 %v699, %v701
  %v705 = vpack.c.bf16 %v704, %v703
  %v706 = vlaneseq
  %v707 = vshrl.u32 %v706, 7
  %v708 = vsub.s32 0, %v707
  %v709 = vrot.slane %v191, %v708
  %v714 = vunpack.c.l.b16 %v196
  %v715 = vunpack.c.l.b16 %v197
  %v716 = vunpack.c.l.b16 %v198
  %v717 = vunpack.c.l.b16 %v199
  %v718 = vpack.c.b16 %v715, %v714
  %v719 = vpack.c.b16 %v717, %v716
  %v723 = vsel %vm149, %v705, 0
  %725 = vmatprep.subr.bf16.mxu0 0
  %726 = vmatpush1.bf16.msra.mxu0 0
  %727 = vmatprep.subr.bf16.mxu0 0
  %728 = vmatpush1.bf16.msra.mxu0 0
  %729 = vmatprep.subr.bf16.mxu0 0
  %730 = vmatpush1.bf16.msra.mxu0 0
  %731 = vmatprep.subr.bf16.mxu0 0
  %732 = vmatpush1.bf16.msra.mxu0 0
  %733 = vmatprep.subr.bf16.mxu0 0
  %734 = vmatpush1.bf16.msra.mxu0 0
  %735 = vmatprep.subr.bf16.mxu0 0
  %736 = vmatpush1.bf16.msra.mxu0 0
  %737 = vmatprep.subr.bf16.mxu0 0
  %738 = vmatpush1.bf16.msra.mxu0 %v719
  %739 = vmatprep.subr.bf16.mxu0 0
  %740 = vmatpush1.bf16.msra.mxu0 %v718
  %741 = vmatprep.subr.bf16.mxu0 0
  %742 = vmatpush2.bf16.msra.mxu0 0
  %743 = vmatprep.subr.bf16.mxu0 0
  %744 = vmatpush2.bf16.msra.mxu0 0
  %745 = vmatprep.subr.bf16.mxu0 0
  %746 = vmatpush2.bf16.msra.mxu0 0
  %747 = vmatprep.subr.bf16.mxu0 0
  %748 = vmatpush2.bf16.msra.mxu0 0
  %749 = vmatprep.subr.bf16.mxu0 0
  %750 = vmatpush2.bf16.msra.mxu0 0
  %751 = vmatprep.subr.bf16.mxu0 0
  %752 = vmatpush2.bf16.msra.mxu0 0
  %753 = vmatprep.subr.bf16.mxu0 0
  %754 = vmatpush2.bf16.msra.mxu0 0
  %755 = vmatprep.subr.bf16.mxu0 0
  %756 = vmatpush2.bf16.msra.mxu0 0
  %757 = vmatprep.mubr.bf16.mxu0 0
  %758 = vmatmul.mubr.bf16.gmra.mxu0 %v723
  %v759 = vpop.f32.mrf.mxu0
  %v760 = vadd.f32 %v709, %v759
  %v761 = vpop.f32.mrf.mxu0
  %v762 = vpop.f32.mrf.mxu0
  %v763 = vadd.f32 %v709, %v762
  %v764 = vpop.f32.mrf.mxu0
  %765 = vdwg.mxu0
  %v766 = vmax.f32 %v760, 0.0
  %v767 = vmax.f32 %v763, 0.0
  %v768 = vpack.c.bf16 %v767, %v766
  %v785 = vunpack.c.l.b16 %v200
  %v786 = vunpack.c.l.b16 %v201
  %v787 = vunpack.c.l.b16 %v202
  %v788 = vunpack.c.l.b16 %v203
  %v789 = vunpack.c.l.b16 %v204
  %v790 = vunpack.c.l.b16 %v205
  %v791 = vunpack.c.l.b16 %v206
  %v792 = vunpack.c.l.b16 %v207
  %v793 = vunpack.c.l.b16 %v208
  %v794 = vunpack.c.l.b16 %v209
  %v795 = vunpack.c.l.b16 %v210
  %v796 = vunpack.c.l.b16 %v211
  %v797 = vunpack.c.l.b16 %v212
  %v798 = vunpack.c.l.b16 %v213
  %v799 = vunpack.c.l.b16 %v214
  %v800 = vunpack.c.l.b16 %v215
  %v801 = vpack.c.b16 %v786, %v785
  %v802 = vpack.c.b16 %v788, %v787
  %v803 = vpack.c.b16 %v790, %v789
  %v804 = vpack.c.b16 %v792, %v791
  %v805 = vpack.c.b16 %v794, %v793
  %v806 = vpack.c.b16 %v796, %v795
  %v807 = vpack.c.b16 %v798, %v797
  %v808 = vpack.c.b16 %v800, %v799
  %818 = vrot.lane.b32.xlu0 %v616, 96
  %v819 = vpop.permute.xlu0 %818
  %821 = vmatprep.subr.bf16.mxu0 0
  %822 = vmatpush1.bf16.msra.mxu0 %v808
  %823 = vmatprep.subr.bf16.mxu0 0
  %824 = vmatpush1.bf16.msra.mxu0 %v807
  %825 = vmatprep.subr.bf16.mxu0 0
  %826 = vmatpush1.bf16.msra.mxu0 %v806
  %827 = vmatprep.subr.bf16.mxu0 0
  %828 = vmatpush1.bf16.msra.mxu0 %v805
  %829 = vmatprep.subr.bf16.mxu0 0
  %830 = vmatpush1.bf16.msra.mxu0 %v804
  %831 = vmatprep.subr.bf16.mxu0 0
  %832 = vmatpush1.bf16.msra.mxu0 %v803
  %833 = vmatprep.subr.bf16.mxu0 0
  %834 = vmatpush1.bf16.msra.mxu0 %v802
  %835 = vmatprep.subr.bf16.mxu0 0
  %836 = vmatpush1.bf16.msra.mxu0 %v801
  %837 = vmatprep.subr.bf16.mxu0 0
  %838 = vmatpush2.bf16.msra.mxu0 0
  %839 = vmatprep.subr.bf16.mxu0 0
  %840 = vmatpush2.bf16.msra.mxu0 0
  %841 = vmatprep.subr.bf16.mxu0 0
  %842 = vmatpush2.bf16.msra.mxu0 0
  %843 = vmatprep.subr.bf16.mxu0 0
  %844 = vmatpush2.bf16.msra.mxu0 0
  %845 = vmatprep.subr.bf16.mxu0 0
  %846 = vmatpush2.bf16.msra.mxu0 0
  %847 = vmatprep.subr.bf16.mxu0 0
  %848 = vmatpush2.bf16.msra.mxu0 0
  %849 = vmatprep.subr.bf16.mxu0 0
  %850 = vmatpush2.bf16.msra.mxu0 0
  %851 = vmatprep.subr.bf16.mxu0 0
  %852 = vmatpush2.bf16.msra.mxu0 0
  %853 = vmatprep.mubr.bf16.mxu0 0
  %854 = vmatmul.mubr.bf16.gmra.mxu0 %v768
  %v855 = vpop.f32.mrf.mxu0
  %v856 = vadd.f32 %v819, %v855
  %v857 = vpop.f32.mrf.mxu0
  %v858 = vpop.f32.mrf.mxu0
  %v859 = vadd.f32 %v819, %v858
  %v860 = vpop.f32.mrf.mxu0
  %861 = vdwg.mxu0
  %v862 = vadd.f32 %v667, %v856
  %v863 = vadd.f32 %v668, %v859
  %v864 = vld [vmem:[%s4 + $0x4] sm:$0x1]
  %v865 = vld [vmem:[%s4 + $0x5] sm:$0x1]
  %v866 = vld [vmem:[%s4 + $0x6] sm:$0x1]
  %v867 = vld [vmem:[%s1 + $0x20] sm:$0xf]
  %v868 = vld [vmem:[%s1 + $0x24] sm:$0xf]
  %v869 = vld [vmem:[%s1 + $0x28] sm:$0xf]
  %v870 = vld [vmem:[%s1 + $0x2c] sm:$0xf]
  %v871 = vld [vmem:[%s1 + $0x30] sm:$0xf]
  %v872 = vld [vmem:[%s1 + $0x34] sm:$0xf]
  %v873 = vld [vmem:[%s1 + $0x38] sm:$0xf]
  %v874 = vld [vmem:[%s1 + $0x3c] sm:$0xf]
  %v875 = vld [vmem:[%s2 + $0x80] sm:$0xf]
  %v876 = vld [vmem:[%s2 + $0x84] sm:$0xf]
  %v877 = vld [vmem:[%s2 + $0x88] sm:$0xf]
  %v878 = vld [vmem:[%s2 + $0x8c] sm:$0xf]
  %v879 = vld [vmem:[%s2 + $0x90] sm:$0xf]
  %v880 = vld [vmem:[%s2 + $0x94] sm:$0xf]
  %v881 = vld [vmem:[%s2 + $0x98] sm:$0xf]
  %v882 = vld [vmem:[%s2 + $0x9c] sm:$0xf]
  %v883 = vld [vmem:[%s2 + $0xa0] sm:$0xf]
  %v884 = vld [vmem:[%s2 + $0xa4] sm:$0xf]
  %v885 = vld [vmem:[%s2 + $0xa8] sm:$0xf]
  %v886 = vld [vmem:[%s2 + $0xac] sm:$0xf]
  %v887 = vld [vmem:[%s2 + $0xb0] sm:$0xf]
  %v888 = vld [vmem:[%s2 + $0xb4] sm:$0xf]
  %v889 = vld [vmem:[%s2 + $0xb8] sm:$0xf]
  %v890 = vld [vmem:[%s2 + $0xbc] sm:$0xf]
  %v891 = vsel %vm149, %v862, 0.0
  %892 = vadd.xlane.f32.xlu0 %v891
  %v893 = vpop.xlane.xlu0 %892
  %v894 = vsel %vm149, %v863, 0.0
  %895 = vadd.xlane.f32.xlu0 %v894
  %v896 = vpop.xlane.xlu0 %895
  %v897 = vmul.f32 %v893, %v156
  %v898 = vmul.f32 %v896, %v156
  %v899 = vsub.f32 %v862, %v897
  %v900 = vsub.f32 %v863, %v898
  %v901 = vmul.f32 %v899, %v899
  %v902 = vmul.f32 %v900, %v900
  %v903 = vsel %vm149, %v901, 0.0
  %904 = vadd.xlane.f32.xlu0 %v903
  %v905 = vpop.xlane.xlu0 %904
  %v906 = vsel %vm149, %v902, 0.0
  %907 = vadd.xlane.f32.xlu0 %v906
  %v908 = vpop.xlane.xlu0 %907
  %v909 = vmul.f32 %v905, %v156
  %v910 = vmul.f32 %v908, %v156
  %v911 = vadd.f32 %v909, 1e-05
  %v912 = vadd.f32 %v910, 1e-05
  %v913 = vrsqrt.pop %v911
  %v914 = vrsqrt.pop %v912
  %v915 = vmul.f32 %v899, %v913
  %v916 = vmul.f32 %v900, %v914
  %v917 = vlaneseq
  %v918 = vshrl.u32 %v917, 7
  %v919 = vsub.s32 0, %v918
  %v920 = vrot.slane %v864, %v919
  %v921 = vmul.f32 %v915, %v920
  %v922 = vmul.f32 %v916, %v920
  %924 = vrot.lane.b32.xlu0 %v920, 96
  %v925 = vpop.permute.xlu0 %924
  %v927 = vadd.f32 %v921, %v925
  %v928 = vadd.f32 %v922, %v925
  %v929 = vpack.c.bf16 %v928, %v927
  %v934 = vunpack.c.l.b16 %v867
  %v935 = vunpack.c.l.b16 %v868
  %v936 = vunpack.c.l.b16 %v869
  %v937 = vunpack.c.l.b16 %v870
  %v938 = vpack.c.b16 %v935, %v934
  %v939 = vpack.c.b16 %v937, %v936
  %v943 = vsel %vm149, %v929, 0
  %945 = vmatprep.subr.bf16.mxu0 0
  %946 = vmatpush1.bf16.msra.mxu0 0
  %947 = vmatprep.subr.bf16.mxu0 0
  %948 = vmatpush1.bf16.msra.mxu0 0
  %949 = vmatprep.subr.bf16.mxu0 0
  %950 = vmatpush1.bf16.msra.mxu0 0
  %951 = vmatprep.subr.bf16.mxu0 0
  %952 = vmatpush1.bf16.msra.mxu0 0
  %953 = vmatprep.subr.bf16.mxu0 0
  %954 = vmatpush1.bf16.msra.mxu0 0
  %955 = vmatprep.subr.bf16.mxu0 0
  %956 = vmatpush1.bf16.msra.mxu0 0
  %957 = vmatprep.subr.bf16.mxu0 0
  %958 = vmatpush1.bf16.msra.mxu0 %v939
  %959 = vmatprep.subr.bf16.mxu0 0
  %960 = vmatpush1.bf16.msra.mxu0 %v938
  %961 = vmatprep.subr.bf16.mxu0 0
  %962 = vmatpush2.bf16.msra.mxu0 0
  %963 = vmatprep.subr.bf16.mxu0 0
  %964 = vmatpush2.bf16.msra.mxu0 0
  %965 = vmatprep.subr.bf16.mxu0 0
  %966 = vmatpush2.bf16.msra.mxu0 0
  %967 = vmatprep.subr.bf16.mxu0 0
  %968 = vmatpush2.bf16.msra.mxu0 0
  %969 = vmatprep.subr.bf16.mxu0 0
  %970 = vmatpush2.bf16.msra.mxu0 0
  %971 = vmatprep.subr.bf16.mxu0 0
  %972 = vmatpush2.bf16.msra.mxu0 0
  %973 = vmatprep.subr.bf16.mxu0 0
  %974 = vmatpush2.bf16.msra.mxu0 0
  %975 = vmatprep.subr.bf16.mxu0 0
  %976 = vmatpush2.bf16.msra.mxu0 0
  %977 = vmatprep.mubr.bf16.mxu0 0
  %978 = vmatmul.mubr.bf16.gmra.mxu0 %v943
  %v979 = vpop.f32.mrf.mxu0
  %v980 = vadd.f32 0.0, %v979
  %v981 = vpop.f32.mrf.mxu0
  %v982 = vpop.f32.mrf.mxu0
  %v983 = vadd.f32 0.0, %v982
  %v984 = vpop.f32.mrf.mxu0
  %985 = vdwg.mxu0
  %988 = vrot.lane.b32.xlu0 %v980, 96
  %v989 = vpop.permute.xlu0 %988
  %990 = vrot.lane.b32.xlu0 %v983, 96
  %v991 = vpop.permute.xlu0 %990
  %994 = vxpose.xlu0.b32.start [1/16] %v989, 128
  %995 = vxpose.xlu0.b32.cont [2/16] %v991, 128
  %996 = vxpose.xlu0.b32.cont [3/16] 0.0, 128
  %997 = vxpose.xlu0.b32.cont [4/16] 0.0, 128
  %998 = vxpose.xlu0.b32.cont [5/16] 0.0, 128
  %999 = vxpose.xlu0.b32.cont [6/16] 0.0, 128
  %1000 = vxpose.xlu0.b32.cont [7/16] 0.0, 128
  %1001 = vxpose.xlu0.b32.cont [8/16] 0.0, 128
  %1002 = vxpose.xlu0.b32.cont [9/16] 0.0, 128
  %1003 = vxpose.xlu0.b32.cont [10/16] 0.0, 128
  %1004 = vxpose.xlu0.b32.cont [11/16] 0.0, 128
  %1005 = vxpose.xlu0.b32.cont [12/16] 0.0, 128
  %1006 = vxpose.xlu0.b32.cont [13/16] 0.0, 128
  %1007 = vxpose.xlu0.b32.cont [14/16] 0.0, 128
  %1008 = vxpose.xlu0.b32.cont [15/16] 0.0, 128
  %1009 = vxpose.xlu0.b32.end [16/16] 0.0, 128
  %v1010 = vpop.trf.xlu0
  %v1011 = vpop.trf.xlu0
  %v1012 = vpop.trf.xlu0
  %v1013 = vpop.trf.xlu0
  %v1014 = vpop.trf.xlu0
  %v1015 = vpop.trf.xlu0
  %v1016 = vpop.trf.xlu0
  %v1017 = vpop.trf.xlu0
  %v1018 = vpop.trf.xlu0
  %v1019 = vpop.trf.xlu0
  %v1020 = vpop.trf.xlu0
  %v1021 = vpop.trf.xlu0
  %v1022 = vpop.trf.xlu0
  %v1023 = vpop.trf.xlu0
  %v1024 = vpop.trf.xlu0
  %v1025 = vpop.trf.xlu0
  %1030 = vrot.lane.b32.xlu0 %v1010, 16
  %v1031 = vpop.permute.xlu0 %1030
  %1032 = vrot.lane.b32.xlu0 %v1011, 16
  %v1033 = vpop.permute.xlu0 %1032
  %1034 = vrot.lane.b32.xlu0 %v1012, 16
  %v1035 = vpop.permute.xlu0 %1034
  %1036 = vrot.lane.b32.xlu0 %v1013, 16
  %v1037 = vpop.permute.xlu0 %1036
  %1042 = vrot.lane.b32.xlu0 %v1010, 32
  %v1043 = vpop.permute.xlu0 %1042
  %1044 = vrot.lane.b32.xlu0 %v1011, 32
  %v1045 = vpop.permute.xlu0 %1044
  %1046 = vrot.lane.b32.xlu0 %v1012, 32
  %v1047 = vpop.permute.xlu0 %1046
  %1048 = vrot.lane.b32.xlu0 %v1013, 32
  %v1049 = vpop.permute.xlu0 %1048
  %1054 = vrot.lane.b32.xlu0 %v1010, 48
  %v1055 = vpop.permute.xlu0 %1054
  %1056 = vrot.lane.b32.xlu0 %v1011, 48
  %v1057 = vpop.permute.xlu0 %1056
  %1058 = vrot.lane.b32.xlu0 %v1012, 48
  %v1059 = vpop.permute.xlu0 %1058
  %1060 = vrot.lane.b32.xlu0 %v1013, 48
  %v1061 = vpop.permute.xlu0 %1060
  %v1066 = vsel %vm391, %v1010, %v1031
  %v1067 = vsel %vm391, %v1011, %v1033
  %v1068 = vsel %vm391, %v1012, %v1035
  %v1069 = vsel %vm391, %v1013, %v1037
  %v1070 = vsel %vm149, %v1066, %v1043
  %v1071 = vsel %vm149, %v1067, %v1045
  %v1072 = vsel %vm149, %v1068, %v1047
  %v1073 = vsel %vm149, %v1069, %v1049
  %v1074 = vsel %vm400, %v1070, %v1055
  %v1075 = vsel %vm400, %v1071, %v1057
  %v1076 = vsel %vm400, %v1072, %v1059
  %v1077 = vsel %vm400, %v1073, %v1061
  %v1078 = vmul.f32 %v1074, %v23
  %v1079 = vmul.f32 %v1075, %v24
  %v1080 = vmul.f32 %v1076, %v25
  %v1081 = vmul.f32 %v1077, %v26
  %v1082 = vsel %vm149, %v980, 0
  %v1084 = vsel %vm149, %v983, 0
  %1086 = vmatprep.subr.mxu0 0.0
  %1087 = vmatpush1.msra.mxu0 0.0
  %1088 = vmatprep.subr.mxu0 0.0
  %1089 = vmatpush1.msra.mxu0 0.0
  %1090 = vmatprep.subr.mxu0 0.0
  %1091 = vmatpush1.msra.mxu0 0.0
  %1092 = vmatprep.subr.mxu0 0.0
  %1093 = vmatpush1.msra.mxu0 0.0
  %1094 = vmatprep.subr.mxu0 0.0
  %1095 = vmatpush1.msra.mxu0 0.0
  %1096 = vmatprep.subr.mxu0 0.0
  %1097 = vmatpush1.msra.mxu0 0.0
  %1098 = vmatprep.subr.mxu0 0.0
  %1099 = vmatpush1.msra.mxu0 0.0
  %1100 = vmatprep.subr.mxu0 0.0
  %1101 = vmatpush1.msra.mxu0 0.0
  %1102 = vmatprep.subr.mxu0 0.0
  %1103 = vmatpush1.msra.mxu0 0.0
  %1104 = vmatprep.subr.mxu0 0.0
  %1105 = vmatpush1.msra.mxu0 0.0
  %1106 = vmatprep.subr.mxu0 0.0
  %1107 = vmatpush1.msra.mxu0 0.0
  %1108 = vmatprep.subr.mxu0 0.0
  %1109 = vmatpush1.msra.mxu0 0.0
  %1110 = vmatprep.subr.mxu0 0.0
  %1111 = vmatpush1.msra.mxu0 %v1081
  %1112 = vmatprep.subr.mxu0 0.0
  %1113 = vmatpush1.msra.mxu0 %v1080
  %1114 = vmatprep.subr.mxu0 0.0
  %1115 = vmatpush1.msra.mxu0 %v1079
  %1116 = vmatprep.subr.mxu0 0.0
  %1117 = vmatpush1.msra.mxu0 %v1078
  %1118 = vmatprep.subr.mxu0 0.0
  %1119 = vmatpush2.msra.mxu0 0.0
  %1120 = vmatprep.subr.mxu0 0.0
  %1121 = vmatpush2.msra.mxu0 0.0
  %1122 = vmatprep.subr.mxu0 0.0
  %1123 = vmatpush2.msra.mxu0 0.0
  %1124 = vmatprep.subr.mxu0 0.0
  %1125 = vmatpush2.msra.mxu0 0.0
  %1126 = vmatprep.subr.mxu0 0.0
  %1127 = vmatpush2.msra.mxu0 0.0
  %1128 = vmatprep.subr.mxu0 0.0
  %1129 = vmatpush2.msra.mxu0 0.0
  %1130 = vmatprep.subr.mxu0 0.0
  %1131 = vmatpush2.msra.mxu0 0.0
  %1132 = vmatprep.subr.mxu0 0.0
  %1133 = vmatpush2.msra.mxu0 0.0
  %1134 = vmatprep.subr.mxu0 0.0
  %1135 = vmatpush2.msra.mxu0 0.0
  %1136 = vmatprep.subr.mxu0 0.0
  %1137 = vmatpush2.msra.mxu0 0.0
  %1138 = vmatprep.subr.mxu0 0.0
  %1139 = vmatpush2.msra.mxu0 0.0
  %1140 = vmatprep.subr.mxu0 0.0
  %1141 = vmatpush2.msra.mxu0 0.0
  %1142 = vmatprep.subr.mxu0 0.0
  %1143 = vmatpush2.msra.mxu0 0.0
  %1144 = vmatprep.subr.mxu0 0.0
  %1145 = vmatpush2.msra.mxu0 0.0
  %1146 = vmatprep.subr.mxu0 0.0
  %1147 = vmatpush2.msra.mxu0 0.0
  %1148 = vmatprep.subr.mxu0 0.0
  %1149 = vmatpush2.msra.mxu0 0.0
  %1150 = vmatprep.mubr.f32.mxu0 0.0
  %1151 = vmatmul.mubr.f32.gmra.mxu0 %v1082
  %v1152 = vpop.f32.mrf.mxu0
  %v1153 = vadd.f32 %v21, %v1152
  %v1154 = vpop.f32.mrf.mxu0
  %1155 = vmatprep.mubr.f32.mxu0 0.0
  %1156 = vmatmul.mubr.f32.gmra.mxu0 %v1084
  %v1157 = vpop.f32.mrf.mxu0
  %v1158 = vadd.f32 %v22, %v1157
  %v1159 = vpop.f32.mrf.mxu0
  %1160 = vdwg.mxu0
  %v1161 = vsel %vm488, %v1153, -inf
  %1162 = vmax.xlane.f32.xlu0 %v1161
  %v1163 = vpop.xlane.xlu0 %1162
  %v1164 = vsel %vm488, %v1158, -inf
  %1165 = vmax.xlane.f32.xlu0 %v1164
  %v1166 = vpop.xlane.xlu0 %1165
  %v1167 = vsub.f32 %v1153, %v1163
  %v1168 = vsub.f32 %v1158, %v1166
  %v1169 = vmul.f32 %v1167, 1.442695
  %v1170 = vpow.pop %v1169
  %v1171 = vmul.f32 %v1168, 1.442695
  %v1172 = vpow.pop %v1171
  %1173 = vrot.lane.b32.xlu0 %v980, 64
  %v1174 = vpop.permute.xlu0 %1173
  %1175 = vrot.lane.b32.xlu0 %v983, 64
  %v1176 = vpop.permute.xlu0 %1175
  %v1179 = vsel %vm149, %v1174, 1.0
  %v1180 = vsel %vm149, %v1176, 1.0
  %v1181 = vmul.f32 %v1179, %v27
  %v1182 = vmul.f32 %v1180, %v28
  %v1183 = vmul.f32 %v1179, %v29
  %v1184 = vmul.f32 %v1180, %v30
  %v1185 = vmul.f32 %v1179, %v31
  %v1186 = vmul.f32 %v1180, %v32
  %v1187 = vmul.f32 %v1179, %v33
  %v1188 = vmul.f32 %v1180, %v34
  %v1190 = vsel %vm488, %v1170, 0
  %v1193 = vsel %vm488, %v1172, 0
  %1195 = vmatprep.subr.mxu0 0.0
  %1196 = vmatpush1.msra.mxu0 0.0
  %1197 = vmatprep.subr.mxu0 0.0
  %1198 = vmatpush1.msra.mxu0 0.0
  %1199 = vmatprep.subr.mxu0 0.0
  %1200 = vmatpush1.msra.mxu0 0.0
  %1201 = vmatprep.subr.mxu0 0.0
  %1202 = vmatpush1.msra.mxu0 0.0
  %1203 = vmatprep.subr.mxu0 0.0
  %1204 = vmatpush1.msra.mxu0 0.0
  %1205 = vmatprep.subr.mxu0 0.0
  %1206 = vmatpush1.msra.mxu0 0.0
  %1207 = vmatprep.subr.mxu0 0.0
  %1208 = vmatpush1.msra.mxu0 0.0
  %1209 = vmatprep.subr.mxu0 0.0
  %1210 = vmatpush1.msra.mxu0 0.0
  %1211 = vmatprep.subr.mxu0 0.0
  %1212 = vmatpush1.msra.mxu0 %v1188
  %1213 = vmatprep.subr.mxu0 0.0
  %1214 = vmatpush1.msra.mxu0 %v1187
  %1215 = vmatprep.subr.mxu0 0.0
  %1216 = vmatpush1.msra.mxu0 %v1186
  %1217 = vmatprep.subr.mxu0 0.0
  %1218 = vmatpush1.msra.mxu0 %v1185
  %1219 = vmatprep.subr.mxu0 0.0
  %1220 = vmatpush1.msra.mxu0 %v1184
  %1221 = vmatprep.subr.mxu0 0.0
  %1222 = vmatpush1.msra.mxu0 %v1183
  %1223 = vmatprep.subr.mxu0 0.0
  %1224 = vmatpush1.msra.mxu0 %v1182
  %1225 = vmatprep.subr.mxu0 0.0
  %1226 = vmatpush1.msra.mxu0 %v1181
  %1227 = vmatprep.subr.mxu0 0.0
  %1228 = vmatpush2.msra.mxu0 0.0
  %1229 = vmatprep.subr.mxu0 0.0
  %1230 = vmatpush2.msra.mxu0 0.0
  %1231 = vmatprep.subr.mxu0 0.0
  %1232 = vmatpush2.msra.mxu0 0.0
  %1233 = vmatprep.subr.mxu0 0.0
  %1234 = vmatpush2.msra.mxu0 0.0
  %1235 = vmatprep.subr.mxu0 0.0
  %1236 = vmatpush2.msra.mxu0 0.0
  %1237 = vmatprep.subr.mxu0 0.0
  %1238 = vmatpush2.msra.mxu0 0.0
  %1239 = vmatprep.subr.mxu0 0.0
  %1240 = vmatpush2.msra.mxu0 0.0
  %1241 = vmatprep.subr.mxu0 0.0
  %1242 = vmatpush2.msra.mxu0 0.0
  %1243 = vmatprep.subr.mxu0 0.0
  %1244 = vmatpush2.msra.mxu0 0.0
  %1245 = vmatprep.subr.mxu0 0.0
  %1246 = vmatpush2.msra.mxu0 0.0
  %1247 = vmatprep.subr.mxu0 0.0
  %1248 = vmatpush2.msra.mxu0 0.0
  %1249 = vmatprep.subr.mxu0 0.0
  %1250 = vmatpush2.msra.mxu0 0.0
  %1251 = vmatprep.subr.mxu0 0.0
  %1252 = vmatpush2.msra.mxu0 0.0
  %1253 = vmatprep.subr.mxu0 0.0
  %1254 = vmatpush2.msra.mxu0 0.0
  %1255 = vmatprep.subr.mxu0 0.0
  %1256 = vmatpush2.msra.mxu0 0.0
  %1257 = vmatprep.subr.mxu0 0.0
  %1258 = vmatpush2.msra.mxu0 0.0
  %1259 = vmatprep.mubr.f32.mxu0 0.0
  %1260 = vmatmul.mubr.f32.gmra.mxu0 %v1190
  %v1261 = vpop.f32.mrf.mxu0
  %v1262 = vadd.f32 0.0, %v1261
  %v1263 = vpop.f32.mrf.mxu0
  %1264 = vmatprep.mubr.f32.mxu0 0.0
  %1265 = vmatmul.mubr.f32.gmra.mxu0 %v1193
  %v1266 = vpop.f32.mrf.mxu0
  %v1267 = vadd.f32 0.0, %v1266
  %v1268 = vpop.f32.mrf.mxu0
  %1269 = vdwg.mxu0
  %v1270 = vadd.f32 %v1262, 1e-30
  %v1271 = vadd.f32 %v1267, 1e-30
  %v1272 = vrcp.pop %v1270
  %v1273 = vrcp.pop %v1271
  %1276 = vrot.lane.b32.xlu0 %v1272, 96
  %v1277 = vpop.permute.xlu0 %1276
  %1278 = vrot.lane.b32.xlu0 %v1273, 96
  %v1279 = vpop.permute.xlu0 %1278
  %v1282 = vmul.f32 %v1262, %v1277
  %v1283 = vmul.f32 %v1267, %v1279
  %v1284 = vpack.c.bf16 %v1283, %v1282
  %v1285 = vlaneseq
  %v1286 = vshrl.u32 %v1285, 7
  %v1287 = vsub.s32 0, %v1286
  %v1288 = vrot.slane %v865, %v1287
  %1289 = vrot.lane.b32.xlu0 %v938, 32
  %v1290 = vpop.permute.xlu0 %1289
  %1291 = vrot.lane.b32.xlu0 %v939, 32
  %v1292 = vpop.permute.xlu0 %1291
  %v1296 = vsel %vm149, %v1284, 0
  %1298 = vmatprep.subr.bf16.mxu0 0
  %1299 = vmatpush1.bf16.msra.mxu0 0
  %1300 = vmatprep.subr.bf16.mxu0 0
  %1301 = vmatpush1.bf16.msra.mxu0 0
  %1302 = vmatprep.subr.bf16.mxu0 0
  %1303 = vmatpush1.bf16.msra.mxu0 0
  %1304 = vmatprep.subr.bf16.mxu0 0
  %1305 = vmatpush1.bf16.msra.mxu0 0
  %1306 = vmatprep.subr.bf16.mxu0 0
  %1307 = vmatpush1.bf16.msra.mxu0 0
  %1308 = vmatprep.subr.bf16.mxu0 0
  %1309 = vmatpush1.bf16.msra.mxu0 0
  %1310 = vmatprep.subr.bf16.mxu0 0
  %1311 = vmatpush1.bf16.msra.mxu0 %v1292
  %1312 = vmatprep.subr.bf16.mxu0 0
  %1313 = vmatpush1.bf16.msra.mxu0 %v1290
  %1314 = vmatprep.subr.bf16.mxu0 0
  %1315 = vmatpush2.bf16.msra.mxu0 0
  %1316 = vmatprep.subr.bf16.mxu0 0
  %1317 = vmatpush2.bf16.msra.mxu0 0
  %1318 = vmatprep.subr.bf16.mxu0 0
  %1319 = vmatpush2.bf16.msra.mxu0 0
  %1320 = vmatprep.subr.bf16.mxu0 0
  %1321 = vmatpush2.bf16.msra.mxu0 0
  %1322 = vmatprep.subr.bf16.mxu0 0
  %1323 = vmatpush2.bf16.msra.mxu0 0
  %1324 = vmatprep.subr.bf16.mxu0 0
  %1325 = vmatpush2.bf16.msra.mxu0 0
  %1326 = vmatprep.subr.bf16.mxu0 0
  %1327 = vmatpush2.bf16.msra.mxu0 0
  %1328 = vmatprep.subr.bf16.mxu0 0
  %1329 = vmatpush2.bf16.msra.mxu0 0
  %1330 = vmatprep.mubr.bf16.mxu0 0
  %1331 = vmatmul.mubr.bf16.gmra.mxu0 %v1296
  %v1332 = vpop.f32.mrf.mxu0
  %v1333 = vadd.f32 %v1288, %v1332
  %v1334 = vpop.f32.mrf.mxu0
  %v1335 = vpop.f32.mrf.mxu0
  %v1336 = vadd.f32 %v1288, %v1335
  %v1337 = vpop.f32.mrf.mxu0
  %1338 = vdwg.mxu0
  %v1339 = vadd.f32 %v862, %v1333
  %v1340 = vadd.f32 %v863, %v1336
  %v1341 = vsel %vm149, %v1339, 0.0
  %1342 = vadd.xlane.f32.xlu0 %v1341
  %v1343 = vpop.xlane.xlu0 %1342
  %v1344 = vsel %vm149, %v1340, 0.0
  %1345 = vadd.xlane.f32.xlu0 %v1344
  %v1346 = vpop.xlane.xlu0 %1345
  %v1347 = vmul.f32 %v1343, %v156
  %v1348 = vmul.f32 %v1346, %v156
  %v1349 = vsub.f32 %v1339, %v1347
  %v1350 = vsub.f32 %v1340, %v1348
  %v1351 = vmul.f32 %v1349, %v1349
  %v1352 = vmul.f32 %v1350, %v1350
  %v1353 = vsel %vm149, %v1351, 0.0
  %1354 = vadd.xlane.f32.xlu0 %v1353
  %v1355 = vpop.xlane.xlu0 %1354
  %v1356 = vsel %vm149, %v1352, 0.0
  %1357 = vadd.xlane.f32.xlu0 %v1356
  %v1358 = vpop.xlane.xlu0 %1357
  %v1359 = vmul.f32 %v1355, %v156
  %v1360 = vmul.f32 %v1358, %v156
  %v1361 = vadd.f32 %v1359, 1e-05
  %v1362 = vadd.f32 %v1360, 1e-05
  %v1363 = vrsqrt.pop %v1361
  %v1364 = vrsqrt.pop %v1362
  %v1365 = vmul.f32 %v1349, %v1363
  %v1366 = vmul.f32 %v1350, %v1364
  %1367 = vrot.lane.b32.xlu0 %v920, 64
  %v1368 = vpop.permute.xlu0 %1367
  %v1370 = vmul.f32 %v1365, %v1368
  %v1371 = vmul.f32 %v1366, %v1368
  %1372 = vrot.lane.b32.xlu0 %v920, 32
  %v1373 = vpop.permute.xlu0 %1372
  %v1375 = vadd.f32 %v1370, %v1373
  %v1376 = vadd.f32 %v1371, %v1373
  %v1377 = vpack.c.bf16 %v1376, %v1375
  %v1378 = vlaneseq
  %v1379 = vshrl.u32 %v1378, 7
  %v1380 = vsub.s32 0, %v1379
  %v1381 = vrot.slane %v866, %v1380
  %v1386 = vunpack.c.l.b16 %v871
  %v1387 = vunpack.c.l.b16 %v872
  %v1388 = vunpack.c.l.b16 %v873
  %v1389 = vunpack.c.l.b16 %v874
  %v1390 = vpack.c.b16 %v1387, %v1386
  %v1391 = vpack.c.b16 %v1389, %v1388
  %v1395 = vsel %vm149, %v1377, 0
  %1397 = vmatprep.subr.bf16.mxu0 0
  %1398 = vmatpush1.bf16.msra.mxu0 0
  %1399 = vmatprep.subr.bf16.mxu0 0
  %1400 = vmatpush1.bf16.msra.mxu0 0
  %1401 = vmatprep.subr.bf16.mxu0 0
  %1402 = vmatpush1.bf16.msra.mxu0 0
  %1403 = vmatprep.subr.bf16.mxu0 0
  %1404 = vmatpush1.bf16.msra.mxu0 0
  %1405 = vmatprep.subr.bf16.mxu0 0
  %1406 = vmatpush1.bf16.msra.mxu0 0
  %1407 = vmatprep.subr.bf16.mxu0 0
  %1408 = vmatpush1.bf16.msra.mxu0 0
  %1409 = vmatprep.subr.bf16.mxu0 0
  %1410 = vmatpush1.bf16.msra.mxu0 %v1391
  %1411 = vmatprep.subr.bf16.mxu0 0
  %1412 = vmatpush1.bf16.msra.mxu0 %v1390
  %1413 = vmatprep.subr.bf16.mxu0 0
  %1414 = vmatpush2.bf16.msra.mxu0 0
  %1415 = vmatprep.subr.bf16.mxu0 0
  %1416 = vmatpush2.bf16.msra.mxu0 0
  %1417 = vmatprep.subr.bf16.mxu0 0
  %1418 = vmatpush2.bf16.msra.mxu0 0
  %1419 = vmatprep.subr.bf16.mxu0 0
  %1420 = vmatpush2.bf16.msra.mxu0 0
  %1421 = vmatprep.subr.bf16.mxu0 0
  %1422 = vmatpush2.bf16.msra.mxu0 0
  %1423 = vmatprep.subr.bf16.mxu0 0
  %1424 = vmatpush2.bf16.msra.mxu0 0
  %1425 = vmatprep.subr.bf16.mxu0 0
  %1426 = vmatpush2.bf16.msra.mxu0 0
  %1427 = vmatprep.subr.bf16.mxu0 0
  %1428 = vmatpush2.bf16.msra.mxu0 0
  %1429 = vmatprep.mubr.bf16.mxu0 0
  %1430 = vmatmul.mubr.bf16.gmra.mxu0 %v1395
  %v1431 = vpop.f32.mrf.mxu0
  %v1432 = vadd.f32 %v1381, %v1431
  %v1433 = vpop.f32.mrf.mxu0
  %v1434 = vpop.f32.mrf.mxu0
  %v1435 = vadd.f32 %v1381, %v1434
  %v1436 = vpop.f32.mrf.mxu0
  %1437 = vdwg.mxu0
  %v1438 = vmax.f32 %v1432, 0.0
  %v1439 = vmax.f32 %v1435, 0.0
  %v1440 = vpack.c.bf16 %v1439, %v1438
  %v1457 = vunpack.c.l.b16 %v875
  %v1458 = vunpack.c.l.b16 %v876
  %v1459 = vunpack.c.l.b16 %v877
  %v1460 = vunpack.c.l.b16 %v878
  %v1461 = vunpack.c.l.b16 %v879
  %v1462 = vunpack.c.l.b16 %v880
  %v1463 = vunpack.c.l.b16 %v881
  %v1464 = vunpack.c.l.b16 %v882
  %v1465 = vunpack.c.l.b16 %v883
  %v1466 = vunpack.c.l.b16 %v884
  %v1467 = vunpack.c.l.b16 %v885
  %v1468 = vunpack.c.l.b16 %v886
  %v1469 = vunpack.c.l.b16 %v887
  %v1470 = vunpack.c.l.b16 %v888
  %v1471 = vunpack.c.l.b16 %v889
  %v1472 = vunpack.c.l.b16 %v890
  %v1473 = vpack.c.b16 %v1458, %v1457
  %v1474 = vpack.c.b16 %v1460, %v1459
  %v1475 = vpack.c.b16 %v1462, %v1461
  %v1476 = vpack.c.b16 %v1464, %v1463
  %v1477 = vpack.c.b16 %v1466, %v1465
  %v1478 = vpack.c.b16 %v1468, %v1467
  %v1479 = vpack.c.b16 %v1470, %v1469
  %v1480 = vpack.c.b16 %v1472, %v1471
  %1490 = vrot.lane.b32.xlu0 %v1288, 96
  %v1491 = vpop.permute.xlu0 %1490
  %1493 = vmatprep.subr.bf16.mxu0 0
  %1494 = vmatpush1.bf16.msra.mxu0 %v1480
  %1495 = vmatprep.subr.bf16.mxu0 0
  %1496 = vmatpush1.bf16.msra.mxu0 %v1479
  %1497 = vmatprep.subr.bf16.mxu0 0
  %1498 = vmatpush1.bf16.msra.mxu0 %v1478
  %1499 = vmatprep.subr.bf16.mxu0 0
  %1500 = vmatpush1.bf16.msra.mxu0 %v1477
  %1501 = vmatprep.subr.bf16.mxu0 0
  %1502 = vmatpush1.bf16.msra.mxu0 %v1476
  %1503 = vmatprep.subr.bf16.mxu0 0
  %1504 = vmatpush1.bf16.msra.mxu0 %v1475
  %1505 = vmatprep.subr.bf16.mxu0 0
  %1506 = vmatpush1.bf16.msra.mxu0 %v1474
  %1507 = vmatprep.subr.bf16.mxu0 0
  %1508 = vmatpush1.bf16.msra.mxu0 %v1473
  %1509 = vmatprep.subr.bf16.mxu0 0
  %1510 = vmatpush2.bf16.msra.mxu0 0
  %1511 = vmatprep.subr.bf16.mxu0 0
  %1512 = vmatpush2.bf16.msra.mxu0 0
  %1513 = vmatprep.subr.bf16.mxu0 0
  %1514 = vmatpush2.bf16.msra.mxu0 0
  %1515 = vmatprep.subr.bf16.mxu0 0
  %1516 = vmatpush2.bf16.msra.mxu0 0
  %1517 = vmatprep.subr.bf16.mxu0 0
  %1518 = vmatpush2.bf16.msra.mxu0 0
  %1519 = vmatprep.subr.bf16.mxu0 0
  %1520 = vmatpush2.bf16.msra.mxu0 0
  %1521 = vmatprep.subr.bf16.mxu0 0
  %1522 = vmatpush2.bf16.msra.mxu0 0
  %1523 = vmatprep.subr.bf16.mxu0 0
  %1524 = vmatpush2.bf16.msra.mxu0 0
  %1525 = vmatprep.mubr.bf16.mxu0 0
  %1526 = vmatmul.mubr.bf16.gmra.mxu0 %v1440
  %v1527 = vpop.f32.mrf.mxu0
  %v1528 = vadd.f32 %v1491, %v1527
  %v1529 = vpop.f32.mrf.mxu0
  %v1530 = vpop.f32.mrf.mxu0
  %v1531 = vadd.f32 %v1491, %v1530
  %v1532 = vpop.f32.mrf.mxu0
  %1533 = vdwg.mxu0
  %v1534 = vadd.f32 %v1339, %v1528
  %v1535 = vadd.f32 %v1340, %v1531
  %v1536 = vld [vmem:[%s1 + $0x40] sm:$0xf]
  %v1537 = vld [vmem:[%s1 + $0x44] sm:$0xf]
  %v1538 = vld [vmem:[%s1 + $0x48] sm:$0xf]
  %v1539 = vld [vmem:[%s1 + $0x4c] sm:$0xf]
  %v1540 = vpack.c.bf16 %v1535, %v1534
  %v1545 = vunpack.c.l.b16 %v1536
  %v1546 = vunpack.c.l.b16 %v1537
  %v1547 = vunpack.c.l.b16 %v1538
  %v1548 = vunpack.c.l.b16 %v1539
  %v1549 = vpack.c.b16 %v1546, %v1545
  %v1550 = vpack.c.b16 %v1548, %v1547
  %v1554 = vsel %vm149, %v1540, 0
  %1556 = vmatprep.subr.bf16.mxu0 0
  %1557 = vmatpush1.bf16.msra.mxu0 0
  %1558 = vmatprep.subr.bf16.mxu0 0
  %1559 = vmatpush1.bf16.msra.mxu0 0
  %1560 = vmatprep.subr.bf16.mxu0 0
  %1561 = vmatpush1.bf16.msra.mxu0 0
  %1562 = vmatprep.subr.bf16.mxu0 0
  %1563 = vmatpush1.bf16.msra.mxu0 0
  %1564 = vmatprep.subr.bf16.mxu0 0
  %1565 = vmatpush1.bf16.msra.mxu0 0
  %1566 = vmatprep.subr.bf16.mxu0 0
  %1567 = vmatpush1.bf16.msra.mxu0 0
  %1568 = vmatprep.subr.bf16.mxu0 0
  %1569 = vmatpush1.bf16.msra.mxu0 %v1550
  %1570 = vmatprep.subr.bf16.mxu0 0
  %1571 = vmatpush1.bf16.msra.mxu0 %v1549
  %1572 = vmatprep.subr.bf16.mxu0 0
  %1573 = vmatpush2.bf16.msra.mxu0 0
  %1574 = vmatprep.subr.bf16.mxu0 0
  %1575 = vmatpush2.bf16.msra.mxu0 0
  %1576 = vmatprep.subr.bf16.mxu0 0
  %1577 = vmatpush2.bf16.msra.mxu0 0
  %1578 = vmatprep.subr.bf16.mxu0 0
  %1579 = vmatpush2.bf16.msra.mxu0 0
  %1580 = vmatprep.subr.bf16.mxu0 0
  %1581 = vmatpush2.bf16.msra.mxu0 0
  %1582 = vmatprep.subr.bf16.mxu0 0
  %1583 = vmatpush2.bf16.msra.mxu0 0
  %1584 = vmatprep.subr.bf16.mxu0 0
  %1585 = vmatpush2.bf16.msra.mxu0 0
  %1586 = vmatprep.subr.bf16.mxu0 0
  %1587 = vmatpush2.bf16.msra.mxu0 0
  %1588 = vmatprep.mubr.bf16.mxu0 0
  %1589 = vmatmul.mubr.bf16.gmra.mxu0 %v1554
  %v1590 = vpop.f32.mrf.mxu0
  %v1591 = vadd.f32 0.0, %v1590
  %v1592 = vpop.f32.mrf.mxu0
  %v1593 = vpop.f32.mrf.mxu0
  %v1594 = vadd.f32 0.0, %v1593
  %v1595 = vpop.f32.mrf.mxu0
  %1596 = vdwg.mxu0
  %1597 = vst [vmem:[%s5] sm:$0xff] %v1591
  %1598 = vst [vmem:[%s5 + $0x8] sm:$0xff] %v1594
  // Predicated region
  $region22: #{transformer_forward.1} parent=0 // pred_check
    _
  $region23: #{transformer_forward.1} parent=0 // pred_check_branch
    %1600 = sbr.rel (0) target = $region25
  $region24: #{transformer_forward.1} parent=0 // pred_region
    _
  $region25: #{transformer_forward.1} parent=0 // pred_fallthru
    _
  // Predicated region
  $region26: #{transformer_forward.1} parent=0 // pred_check
    _
  $region27: #{transformer_forward.1} parent=0 // pred_check_branch
    %1602 = sbr.rel (0) target = $region29
  $region28: #{transformer_forward.1} parent=0 // pred_region
    _
  $region29: #{transformer_forward.1} parent=0 // pred_fallthru
    _

</llo_original>
